<compile_context>
chip_gen: v7x
topology: tpu7x:2x2x1
jax: 0.10.0
libtpu: 0.0.40
codegen_flags: <defaults>
</compile_context>

<pallas_src>
import functools
import math

import jax
import jax.numpy as jnp
from jax.experimental import pallas as pl
from jax.experimental.pallas import tpu as pltpu


def _encoder_block_kernel(q_ref, k_ref, v_ref,
                          wq2_ref, wk_ref, wv_ref, wo_ref,
                          bql_ref, gamma_ref, beta_ref,
                          out_ref, attnw_ref,
                          *, num_heads, eps):
    Bb, Tq, Dq = q_ref.shape
    _, Tk, Dk = k_ref.shape
    Dv = v_ref.shape[-1]
    H = wk_ref.shape[-1]
    dh = H // num_heads

    # Flatten the batch block so each projection is a single large 2-D MXU matmul.
    q2 = q_ref[...].reshape(Bb * Tq, Dq)
    k2 = k_ref[...].reshape(Bb * Tk, Dk)
    v2 = v_ref[...].reshape(Bb * Tk, Dv)

    # Fused q-side projection: [W_q*1/sqrt(dh) | W_ql] in one matmul, then split lanes in-register.
    qq = jnp.dot(q2, wq2_ref[...], preferred_element_type=jnp.float32)        # (Bb*Tq, 2H)
    Qf = qq[:, :H]                                                             # already scaled
    q_res = qq[:, H:] + bql_ref[...]                                           # AddNorm_Q: q_l(q)

    Kf = jnp.dot(k2, wk_ref[...], preferred_element_type=jnp.float32)         # (Bb*Tk, H)
    Vf = jnp.dot(v2, wv_ref[...], preferred_element_type=jnp.float32)         # (Bb*Tk, H)

    Q3 = Qf.reshape(Bb, Tq, H)
    K3 = Kf.reshape(Bb, Tk, H)
    V3 = Vf.reshape(Bb, Tk, H)

    # Split heads via static lane slices and merge them into the leading batch axis,
    # so the whole multi-head attention is two batched einsums (no per-head matmuls).
    def split_heads(x):                          # (Bb, T, H) -> (num_heads*Bb, T, dh), head-major
        return jnp.concatenate(
            [x[:, :, h * dh:(h + 1) * dh] for h in range(num_heads)], axis=0)

    Qh, Kh, Vh = split_heads(Q3), split_heads(K3), split_heads(V3)

    scores = jnp.einsum('bqd,bkd->bqk', Qh, Kh,
                        preferred_element_type=jnp.float32)                    # (heads*Bb, Tq, Tk)
    scores = scores - jnp.max(scores, axis=-1, keepdims=True)                  # numerical stability
    e = jnp.exp(scores)
    w = e * pl.reciprocal(jnp.sum(e, axis=-1, keepdims=True), approx=True)     # softmax over keys

    attnw_ref[...] = w                                                         # one store per step

    attn = jnp.einsum('bqk,bkd->bqd', w, Vh,
                      preferred_element_type=jnp.float32)                      # (heads*Bb, Tq, dh)

    # transpose_output: put the heads back on the lane axis.
    concat = jnp.concatenate(
        [attn[h * Bb:(h + 1) * Bb] for h in range(num_heads)], axis=-1)        # (Bb, Tq, H)
    attn_out = jnp.dot(concat.reshape(Bb * Tq, H), wo_ref[...],
                       preferred_element_type=jnp.float32)                     # (Bb*Tq, H)

    # AddNorm_Q: residual + LayerNorm over the hidden axis.
    y = attn_out + q_res
    mean = jnp.mean(y, axis=-1, keepdims=True)
    var = jnp.mean((y - mean) ** 2, axis=-1, keepdims=True)
    norm = (y - mean) * jax.lax.rsqrt(var + eps)
    out_ref[...] = norm * gamma_ref[...] + beta_ref[...]                       # (Bb*Tq, H)


def cross_encoder_block_g(q, k, v, params, *, num_heads, block_batch=None):
    B, Tq, Dq = q.shape
    _, Tk, Dk = k.shape
    Dv = v.shape[-1]
    H = params["wq"].shape[1]
    assert H % num_heads == 0, "num_hiddens must be divisible by num_heads"
    dh = H // num_heads

    # Batch-blocking: amortize per-grid-step overhead and feed the MXU with >=256-row matmuls.
    # (On v7x with large B, pass block_batch <= B // 2 so both TensorCores get grid iterations.)
    if block_batch is None:
        bb = max(1, min(B, -(-256 // Tq)))
        while B % bb:
            bb -= 1
    else:
        bb = block_batch
    assert B % bb == 0, "block_batch must divide the batch size"
    if B // bb > 1:
        assert (bb * Tq) % 8 == 0, "block rows must be sublane(8)-aligned when tiling the batch"

    # Fuse W_q (with 1/sqrt(dh) folded in) and the AddNorm_Q q_l weight into one (Dq, 2H) weight
    # -> one q-side matmul, and no per-element scale multiply inside the kernel.
    scale = 1.0 / math.sqrt(dh)
    wq2 = jnp.concatenate([params["wq"] * scale, params["wql"]], axis=1)

    kernel = functools.partial(_encoder_block_kernel, num_heads=num_heads, eps=1e-5)

    def full_spec(shape):
        n = len(shape)
        return pl.BlockSpec(shape, lambda i, _n=n: (0,) * _n)

    in_specs = [
        pl.BlockSpec((bb, Tq, Dq), lambda i: (i, 0, 0)),   # q
        pl.BlockSpec((bb, Tk, Dk), lambda i: (i, 0, 0)),   # k
        pl.BlockSpec((bb, Tk, Dv), lambda i: (i, 0, 0)),   # v
        full_spec((Dq, 2 * H)),                            # [W_q/sqrt(dh) | W_ql] fused
        full_spec((Dk, H)),                                # W_k
        full_spec((Dv, H)),                                # W_v
        full_spec((H, H)),                                 # W_o
        full_spec((1, H)),                                 # q_l bias
        full_spec((1, H)),                                 # LayerNorm gamma
        full_spec((1, H)),                                 # LayerNorm beta
    ]
    out_specs = [
        pl.BlockSpec((bb * Tq, H), lambda i: (i, 0)),                   # out (2-D slab)
        pl.BlockSpec((num_heads * bb, Tq, Tk), lambda i: (i, 0, 0)),    # attn weights (head-major per block)
    ]
    out_shapes = (
        jax.ShapeDtypeStruct((B * Tq, H), jnp.float32),
        jax.ShapeDtypeStruct((B * num_heads, Tq, Tk), jnp.float32),
    )

    flops = (2 * B * Tq * Dq * 2 * H             # fused q-side projection
             + 2 * B * Tk * (Dk + Dv) * H        # K / V projections
             + 4 * B * num_heads * Tq * Tk * dh  # scores + attention @ values
             + 2 * B * Tq * H * H)               # output projection
    bytes_accessed = 4 * (q.size + k.size + v.size
                          + Dq * 2 * H + Dk * H + Dv * H + H * H + 3 * H
                          + B * Tq * H + B * num_heads * Tq * Tk)
    cost = pl.CostEstimate(flops=int(flops),
                           transcendentals=int(B * num_heads * Tq * Tk),
                           bytes_accessed=int(bytes_accessed))

    out2d, attnw_raw = pl.pallas_call(
        kernel,
        out_shape=out_shapes,
        grid_spec=pltpu.PrefetchScalarGridSpec(
            num_scalar_prefetch=0,
            grid=(B // bb,),
            in_specs=in_specs,
            out_specs=out_specs,
        ),
        compiler_params=pltpu.CompilerParams(dimension_semantics=("parallel",)),
        cost_estimate=cost,
    )(q, k, v, wq2, params["wk"], params["wv"], params["wo"],
      params["bql"], params["gamma"], params["beta"])

    out = out2d.reshape(B, Tq, H)
    # Kernel blocks are head-major / batch-minor; reorder to PyTorch's (b*num_heads + h) layout
    # outside the kernel (cheap wrapper-side permute on a small array).
    attn_w = (attnw_raw.reshape(B // bb, num_heads, bb, Tq, Tk)
              .transpose(0, 2, 1, 3, 4)
              .reshape(B * num_heads, Tq, Tk))
    return out, attn_w


def _reference(q, k, v, params, num_heads):
    """Pure-JAX reference mirroring the PyTorch forward (eval mode, valid_lens=None)."""
    H = params["wq"].shape[1]
    dh = H // num_heads
    Q = q @ params["wq"]
    K = k @ params["wk"]
    V = v @ params["wv"]

    def split(X):  # transpose_qkv
        Xr = X.reshape(X.shape[0], X.shape[1], num_heads, dh).transpose(0, 2, 1, 3)
        return Xr.reshape(-1, Xr.shape[2], Xr.shape[3])

    Qh, Kh, Vh = split(Q), split(K), split(V)
    scores = jnp.einsum("bqd,bkd->bqk", Qh, Kh) / math.sqrt(dh)
    w = jax.nn.softmax(scores, axis=-1)
    attn = jnp.einsum("bqk,bkd->bqd", w, Vh)
    attn = attn.reshape(-1, num_heads, attn.shape[1], attn.shape[2]).transpose(0, 2, 1, 3)
    attn = attn.reshape(attn.shape[0], attn.shape[1], -1)
    attn_out = attn @ params["wo"]
    q_proj = q @ params["wql"] + params["bql"][0]
    y = attn_out + q_proj
    mean = jnp.mean(y, axis=-1, keepdims=True)
    var = jnp.mean((y - mean) ** 2, axis=-1, keepdims=True)
    out = (y - mean) / jnp.sqrt(var + 1e-5) * params["gamma"][0] + params["beta"][0]
    return out, w


if __name__ == "__main__":
    # Small shapes consistent with the module.
    B, Tq, Tk = 2, 8, 8
    query_size = key_size = value_size = 16
    num_hiddens, num_heads = 32, 4

    key = jax.random.PRNGKey(0)
    ks = jax.random.split(key, 12)

    q = jax.random.normal(ks[0], (B, Tq, query_size), jnp.float32)
    k = jax.random.normal(ks[1], (B, Tk, key_size), jnp.float32)
    v = jax.random.normal(ks[2], (B, Tk, value_size), jnp.float32)

    params = {
        "wq":    0.1 * jax.random.normal(ks[3], (query_size, num_hiddens), jnp.float32),
        "wk":    0.1 * jax.random.normal(ks[4], (key_size,   num_hiddens), jnp.float32),
        "wv":    0.1 * jax.random.normal(ks[5], (value_size, num_hiddens), jnp.float32),
        "wo":    0.1 * jax.random.normal(ks[6], (num_hiddens, num_hiddens), jnp.float32),
        "wql":   0.1 * jax.random.normal(ks[7], (query_size, num_hiddens), jnp.float32),
        "bql":   0.1 * jax.random.normal(ks[8], (1, num_hiddens), jnp.float32),
        "gamma": jnp.ones((1, num_hiddens), jnp.float32),
        "beta":  jnp.zeros((1, num_hiddens), jnp.float32),
    }

    out, attn_w = cross_encoder_block_g(q, k, v, params, num_heads=num_heads)
    out, attn_w = jax.block_until_ready((out, attn_w))

    ref_out, ref_w = _reference(q, k, v, params, num_heads)
    # Tolerance accounts for the EUP approximate reciprocal in the softmax normalization.
    assert jnp.allclose(out, ref_out, atol=2e-3, rtol=2e-3), "output mismatch"
    assert jnp.allclose(attn_w, ref_w, atol=2e-3, rtol=2e-3), "attention-weight mismatch"

    print("KERNEL_OK")
</pallas_src>

<mosaic_0001>
module attributes {stable_mosaic.version = 11 : i64} {
  func.func @_encoder_block_kernel(%arg0: i32, %arg1: memref<2x8x16xf32, #tpu.memory_space<vmem>>, %arg2: memref<2x8x16xf32, #tpu.memory_space<vmem>>, %arg3: memref<2x8x16xf32, #tpu.memory_space<vmem>>, %arg4: memref<16x64xf32, #tpu.memory_space<vmem>>, %arg5: memref<16x32xf32, #tpu.memory_space<vmem>>, %arg6: memref<16x32xf32, #tpu.memory_space<vmem>>, %arg7: memref<32x32xf32, #tpu.memory_space<vmem>>, %arg8: memref<1x32xf32, #tpu.memory_space<vmem>>, %arg9: memref<1x32xf32, #tpu.memory_space<vmem>>, %arg10: memref<1x32xf32, #tpu.memory_space<vmem>>, %arg11: memref<16x32xf32, #tpu.memory_space<vmem>>, %arg12: memref<8x8x8xf32, #tpu.memory_space<vmem>>) attributes {dimension_semantics = [#tpu.dimension_semantics<parallel>], iteration_bounds = array<i64: 1>, scalar_prefetch = 0 : i64, scratch_operands = 0 : i64, tpu.core_type = #tpu.core_type<tc>, window_params = [{transform_indices = @transform_0, window_bounds = array<i64: 2, 8, 16>}, {transform_indices = @transform_1, window_bounds = array<i64: 2, 8, 16>}, {transform_indices = @transform_2, window_bounds = array<i64: 2, 8, 16>}, {pipeline_mode = #tpu.pipeline_mode<synchronous>, transform_indices = @transform_3, window_bounds = array<i64: 16, 64>}, {pipeline_mode = #tpu.pipeline_mode<synchronous>, transform_indices = @transform_4, window_bounds = array<i64: 16, 32>}, {pipeline_mode = #tpu.pipeline_mode<synchronous>, transform_indices = @transform_5, window_bounds = array<i64: 16, 32>}, {pipeline_mode = #tpu.pipeline_mode<synchronous>, transform_indices = @transform_6, window_bounds = array<i64: 32, 32>}, {pipeline_mode = #tpu.pipeline_mode<synchronous>, transform_indices = @transform_7, window_bounds = array<i64: 1, 32>}, {pipeline_mode = #tpu.pipeline_mode<synchronous>, transform_indices = @transform_8, window_bounds = array<i64: 1, 32>}, {pipeline_mode = #tpu.pipeline_mode<synchronous>, transform_indices = @transform_9, window_bounds = array<i64: 1, 32>}, {transform_indices = @transform_10, window_bounds = array<i64: 16, 32>}, {transform_indices = @transform_11, window_bounds = array<i64: 8, 8, 8>}]} {
    %c0 = arith.constant 0 : index
    %c0_0 = arith.constant 0 : index
    %c0_1 = arith.constant 0 : index
    %0 = vector.load %arg1[%c0, %c0_0, %c0_1] : memref<2x8x16xf32, #tpu.memory_space<vmem>>, vector<2x8x16xf32>
    %1 = vector.shape_cast %0 : vector<2x8x16xf32> to vector<16x16xf32>
    %c0_2 = arith.constant 0 : index
    %c0_3 = arith.constant 0 : index
    %c0_4 = arith.constant 0 : index
    %2 = vector.load %arg2[%c0_2, %c0_3, %c0_4] : memref<2x8x16xf32, #tpu.memory_space<vmem>>, vector<2x8x16xf32>
    %3 = vector.shape_cast %2 : vector<2x8x16xf32> to vector<16x16xf32>
    %c0_5 = arith.constant 0 : index
    %c0_6 = arith.constant 0 : index
    %c0_7 = arith.constant 0 : index
    %4 = vector.load %arg3[%c0_5, %c0_6, %c0_7] : memref<2x8x16xf32, #tpu.memory_space<vmem>>, vector<2x8x16xf32>
    %5 = vector.shape_cast %4 : vector<2x8x16xf32> to vector<16x16xf32>
    %c0_8 = arith.constant 0 : index
    %c0_9 = arith.constant 0 : index
    %6 = vector.load %arg4[%c0_8, %c0_9] : memref<16x64xf32, #tpu.memory_space<vmem>>, vector<16x64xf32>
    %cst = arith.constant dense<0.000000e+00> : vector<16x64xf32>
    %7 = tpu.matmul %1, %6, %cst {dimension_numbers = #tpu.dot_dimension_numbers<[1], [0], [0], [1], [0, 0, 1, 1], [], []>} : vector<16x16xf32>, vector<16x64xf32>, vector<16x64xf32> -> vector<16x64xf32>
    %8 = vector.extract_strided_slice %7 {offsets = [0, 0], sizes = [16, 32], strides = [1, 1]} : vector<16x64xf32> to vector<16x32xf32>
    %9 = vector.extract_strided_slice %7 {offsets = [0, 32], sizes = [16, 32], strides = [1, 1]} : vector<16x64xf32> to vector<16x32xf32>
    %c0_10 = arith.constant 0 : index
    %c0_11 = arith.constant 0 : index
    %10 = vector.load %arg8[%c0_10, %c0_11] : memref<1x32xf32, #tpu.memory_space<vmem>>, vector<1x32xf32>
    %11 = vector.broadcast %10 : vector<1x32xf32> to vector<16x32xf32>
    %12 = arith.addf %9, %11 : vector<16x32xf32>
    %c0_12 = arith.constant 0 : index
    %c0_13 = arith.constant 0 : index
    %13 = vector.load %arg5[%c0_12, %c0_13] : memref<16x32xf32, #tpu.memory_space<vmem>>, vector<16x32xf32>
    %cst_14 = arith.constant dense<0.000000e+00> : vector<16x32xf32>
    %14 = tpu.matmul %3, %13, %cst_14 {dimension_numbers = #tpu.dot_dimension_numbers<[1], [0], [0], [1], [0, 0, 1, 1], [], []>} : vector<16x16xf32>, vector<16x32xf32>, vector<16x32xf32> -> vector<16x32xf32>
    %c0_15 = arith.constant 0 : index
    %c0_16 = arith.constant 0 : index
    %15 = vector.load %arg6[%c0_15, %c0_16] : memref<16x32xf32, #tpu.memory_space<vmem>>, vector<16x32xf32>
    %cst_17 = arith.constant dense<0.000000e+00> : vector<16x32xf32>
    %16 = tpu.matmul %5, %15, %cst_17 {dimension_numbers = #tpu.dot_dimension_numbers<[1], [0], [0], [1], [0, 0, 1, 1], [], []>} : vector<16x16xf32>, vector<16x32xf32>, vector<16x32xf32> -> vector<16x32xf32>
    %17 = vector.shape_cast %8 : vector<16x32xf32> to vector<2x8x32xf32>
    %18 = vector.shape_cast %14 : vector<16x32xf32> to vector<2x8x32xf32>
    %19 = vector.shape_cast %16 : vector<16x32xf32> to vector<2x8x32xf32>
    %20 = vector.extract_strided_slice %17 {offsets = [0, 0, 0], sizes = [2, 8, 8], strides = [1, 1, 1]} : vector<2x8x32xf32> to vector<2x8x8xf32>
    %21 = vector.extract_strided_slice %17 {offsets = [0, 0, 8], sizes = [2, 8, 8], strides = [1, 1, 1]} : vector<2x8x32xf32> to vector<2x8x8xf32>
    %22 = vector.extract_strided_slice %17 {offsets = [0, 0, 16], sizes = [2, 8, 8], strides = [1, 1, 1]} : vector<2x8x32xf32> to vector<2x8x8xf32>
    %23 = vector.extract_strided_slice %17 {offsets = [0, 0, 24], sizes = [2, 8, 8], strides = [1, 1, 1]} : vector<2x8x32xf32> to vector<2x8x8xf32>
    %24 = tpu.concatenate %20, %21, %22, %23 in 0 : vector<2x8x8xf32>, vector<2x8x8xf32>, vector<2x8x8xf32>, vector<2x8x8xf32> -> vector<8x8x8xf32>
    %25 = vector.extract_strided_slice %18 {offsets = [0, 0, 0], sizes = [2, 8, 8], strides = [1, 1, 1]} : vector<2x8x32xf32> to vector<2x8x8xf32>
    %26 = vector.extract_strided_slice %18 {offsets = [0, 0, 8], sizes = [2, 8, 8], strides = [1, 1, 1]} : vector<2x8x32xf32> to vector<2x8x8xf32>
    %27 = vector.extract_strided_slice %18 {offsets = [0, 0, 16], sizes = [2, 8, 8], strides = [1, 1, 1]} : vector<2x8x32xf32> to vector<2x8x8xf32>
    %28 = vector.extract_strided_slice %18 {offsets = [0, 0, 24], sizes = [2, 8, 8], strides = [1, 1, 1]} : vector<2x8x32xf32> to vector<2x8x8xf32>
    %29 = tpu.concatenate %25, %26, %27, %28 in 0 : vector<2x8x8xf32>, vector<2x8x8xf32>, vector<2x8x8xf32>, vector<2x8x8xf32> -> vector<8x8x8xf32>
    %30 = vector.extract_strided_slice %19 {offsets = [0, 0, 0], sizes = [2, 8, 8], strides = [1, 1, 1]} : vector<2x8x32xf32> to vector<2x8x8xf32>
    %31 = vector.extract_strided_slice %19 {offsets = [0, 0, 8], sizes = [2, 8, 8], strides = [1, 1, 1]} : vector<2x8x32xf32> to vector<2x8x8xf32>
    %32 = vector.extract_strided_slice %19 {offsets = [0, 0, 16], sizes = [2, 8, 8], strides = [1, 1, 1]} : vector<2x8x32xf32> to vector<2x8x8xf32>
    %33 = vector.extract_strided_slice %19 {offsets = [0, 0, 24], sizes = [2, 8, 8], strides = [1, 1, 1]} : vector<2x8x32xf32> to vector<2x8x8xf32>
    %34 = tpu.concatenate %30, %31, %32, %33 in 0 : vector<2x8x8xf32>, vector<2x8x8xf32>, vector<2x8x8xf32>, vector<2x8x8xf32> -> vector<8x8x8xf32>
    "tpu.trace_start"() <{level = 10 : i32, message = "bqd,bkd->bqk"}> : () -> ()
    %cst_18 = arith.constant dense<0.000000e+00> : vector<8x8x8xf32>
    %35 = tpu.matmul %24, %29, %cst_18 {dimension_numbers = #tpu.dot_dimension_numbers<[2], [2], [1], [1], [0, 0, 0, 1, 1, 1], [0], [0]>} : vector<8x8x8xf32>, vector<8x8x8xf32>, vector<8x8x8xf32> -> vector<8x8x8xf32>
    "tpu.trace_stop"() : () -> ()
    %cst_19 = arith.constant dense<0xFF800000> : vector<8x8xf32>
    %36 = vector.multi_reduction <maximumf>, %35, %cst_19 [2] : vector<8x8x8xf32> to vector<8x8xf32>
    %37 = vector.shape_cast %36 : vector<8x8xf32> to vector<8x8x1xf32>
    %38 = vector.broadcast %37 : vector<8x8x1xf32> to vector<8x8x8xf32>
    %39 = arith.subf %35, %38 : vector<8x8x8xf32>
    %40 = math.exp %39 : vector<8x8x8xf32>
    %cst_20 = arith.constant dense<0.000000e+00> : vector<8x8xf32>
    %41 = vector.multi_reduction <add>, %40, %cst_20 [2] : vector<8x8x8xf32> to vector<8x8xf32>
    %42 = vector.shape_cast %41 : vector<8x8xf32> to vector<8x8x1xf32>
    %43 = tpu.reciprocal %42 {approx = true} : vector<8x8x1xf32> -> vector<8x8x1xf32>
    %44 = vector.broadcast %43 : vector<8x8x1xf32> to vector<8x8x8xf32>
    %45 = arith.mulf %40, %44 : vector<8x8x8xf32>
    %c0_21 = arith.constant 0 : index
    %c0_22 = arith.constant 0 : index
    %c0_23 = arith.constant 0 : index
    %46 = vector.load %arg12[%c0_21, %c0_22, %c0_23] : memref<8x8x8xf32, #tpu.memory_space<vmem>>, vector<8x8x8xf32>
    tpu.vector_store %arg12[%c0_21, %c0_22, %c0_23], %45 {strides = array<i32>} : memref<8x8x8xf32, #tpu.memory_space<vmem>>, vector<8x8x8xf32>,
    "tpu.trace_start"() <{level = 10 : i32, message = "bqk,bkd->bqd"}> : () -> ()
    %cst_24 = arith.constant dense<0.000000e+00> : vector<8x8x8xf32>
    %47 = tpu.matmul %45, %34, %cst_24 {dimension_numbers = #tpu.dot_dimension_numbers<[2], [1], [1], [2], [0, 0, 0, 1, 1, 2], [0], [0]>} : vector<8x8x8xf32>, vector<8x8x8xf32>, vector<8x8x8xf32> -> vector<8x8x8xf32>
    "tpu.trace_stop"() : () -> ()
    %48 = vector.extract_strided_slice %47 {offsets = [0, 0, 0], sizes = [2, 8, 8], strides = [1, 1, 1]} : vector<8x8x8xf32> to vector<2x8x8xf32>
    %49 = vector.extract_strided_slice %47 {offsets = [2, 0, 0], sizes = [2, 8, 8], strides = [1, 1, 1]} : vector<8x8x8xf32> to vector<2x8x8xf32>
    %50 = vector.extract_strided_slice %47 {offsets = [4, 0, 0], sizes = [2, 8, 8], strides = [1, 1, 1]} : vector<8x8x8xf32> to vector<2x8x8xf32>
    %51 = vector.extract_strided_slice %47 {offsets = [6, 0, 0], sizes = [2, 8, 8], strides = [1, 1, 1]} : vector<8x8x8xf32> to vector<2x8x8xf32>
    %52 = tpu.concatenate %48, %49, %50, %51 in 2 : vector<2x8x8xf32>, vector<2x8x8xf32>, vector<2x8x8xf32>, vector<2x8x8xf32> -> vector<2x8x32xf32>
    %53 = vector.shape_cast %52 : vector<2x8x32xf32> to vector<16x32xf32>
    %c0_25 = arith.constant 0 : index
    %c0_26 = arith.constant 0 : index
    %54 = vector.load %arg7[%c0_25, %c0_26] : memref<32x32xf32, #tpu.memory_space<vmem>>, vector<32x32xf32>
    %cst_27 = arith.constant dense<0.000000e+00> : vector<16x32xf32>
    %55 = tpu.matmul %53, %54, %cst_27 {dimension_numbers = #tpu.dot_dimension_numbers<[1], [0], [0], [1], [0, 0, 1, 1], [], []>} : vector<16x32xf32>, vector<32x32xf32>, vector<16x32xf32> -> vector<16x32xf32>
    %56 = arith.addf %55, %12 : vector<16x32xf32>
    %cst_28 = arith.constant dense<0.000000e+00> : vector<16xf32>
    %57 = vector.multi_reduction <add>, %56, %cst_28 [1] : vector<16x32xf32> to vector<16xf32>
    %58 = vector.shape_cast %57 : vector<16xf32> to vector<16x1xf32>
    %cst_29 = arith.constant 3.200000e+01 : f32
    %59 = vector.broadcast %cst_29 : f32 to vector<16x1xf32>
    %60 = arith.divf %58, %59 : vector<16x1xf32>
    %61 = vector.broadcast %60 : vector<16x1xf32> to vector<16x32xf32>
    %62 = arith.subf %56, %61 : vector<16x32xf32>
    %63 = arith.mulf %62, %62 : vector<16x32xf32>
    %cst_30 = arith.constant dense<0.000000e+00> : vector<16xf32>
    %64 = vector.multi_reduction <add>, %63, %cst_30 [1] : vector<16x32xf32> to vector<16xf32>
    %65 = vector.shape_cast %64 : vector<16xf32> to vector<16x1xf32>
    %cst_31 = arith.constant 3.200000e+01 : f32
    %66 = vector.broadcast %cst_31 : f32 to vector<16x1xf32>
    %67 = arith.divf %65, %66 : vector<16x1xf32>
    %68 = vector.broadcast %60 : vector<16x1xf32> to vector<16x32xf32>
    %69 = arith.subf %56, %68 : vector<16x32xf32>
    %cst_32 = arith.constant 9.99999974E-6 : f32
    %70 = vector.broadcast %cst_32 : f32 to vector<16x1xf32>
    %71 = arith.addf %67, %70 : vector<16x1xf32>
    %72 = math.rsqrt %71 : vector<16x1xf32>
    %73 = vector.broadcast %72 : vector<16x1xf32> to vector<16x32xf32>
    %74 = arith.mulf %69, %73 : vector<16x32xf32>
    %c0_33 = arith.constant 0 : index
    %c0_34 = arith.constant 0 : index
    %75 = vector.load %arg9[%c0_33, %c0_34] : memref<1x32xf32, #tpu.memory_space<vmem>>, vector<1x32xf32>
    %76 = vector.broadcast %75 : vector<1x32xf32> to vector<16x32xf32>
    %77 = arith.mulf %74, %76 : vector<16x32xf32>
    %c0_35 = arith.constant 0 : index
    %c0_36 = arith.constant 0 : index
    %78 = vector.load %arg10[%c0_35, %c0_36] : memref<1x32xf32, #tpu.memory_space<vmem>>, vector<1x32xf32>
    %79 = vector.broadcast %78 : vector<1x32xf32> to vector<16x32xf32>
    %80 = arith.addf %77, %79 : vector<16x32xf32>
    %c0_37 = arith.constant 0 : index
    %c0_38 = arith.constant 0 : index
    %81 = vector.load %arg11[%c0_37, %c0_38] : memref<16x32xf32, #tpu.memory_space<vmem>>, vector<16x32xf32>
    tpu.vector_store %arg11[%c0_37, %c0_38], %80 {strides = array<i32>} : memref<16x32xf32, #tpu.memory_space<vmem>>, vector<16x32xf32>,
    return
  }
  func.func @transform_0(%arg0: i32) -> (i32, i32, i32) {
    %c0_i32 = arith.constant 0 : i32
    %c0_i32_0 = arith.constant 0 : i32
    %c0_i32_1 = arith.constant 0 : i32
    return %arg0, %c0_i32, %c0_i32_0 : i32, i32, i32
  }
  func.func @transform_1(%arg0: i32) -> (i32, i32, i32) {
    %c0_i32 = arith.constant 0 : i32
    %c0_i32_0 = arith.constant 0 : i32
    %c0_i32_1 = arith.constant 0 : i32
    return %arg0, %c0_i32, %c0_i32_0 : i32, i32, i32
  }
  func.func @transform_2(%arg0: i32) -> (i32, i32, i32) {
    %c0_i32 = arith.constant 0 : i32
    %c0_i32_0 = arith.constant 0 : i32
    %c0_i32_1 = arith.constant 0 : i32
    return %arg0, %c0_i32, %c0_i32_0 : i32, i32, i32
  }
  func.func @transform_3(%arg0: i32) -> (i32, i32) {
    %c0_i32 = arith.constant 0 : i32
    %c0_i32_0 = arith.constant 0 : i32
    %c0_i32_1 = arith.constant 0 : i32
    return %c0_i32, %c0_i32_0 : i32, i32
  }
  func.func @transform_4(%arg0: i32) -> (i32, i32) {
    %c0_i32 = arith.constant 0 : i32
    %c0_i32_0 = arith.constant 0 : i32
    %c0_i32_1 = arith.constant 0 : i32
    return %c0_i32, %c0_i32_0 : i32, i32
  }
  func.func @transform_5(%arg0: i32) -> (i32, i32) {
    %c0_i32 = arith.constant 0 : i32
    %c0_i32_0 = arith.constant 0 : i32
    %c0_i32_1 = arith.constant 0 : i32
    return %c0_i32, %c0_i32_0 : i32, i32
  }
  func.func @transform_6(%arg0: i32) -> (i32, i32) {
    %c0_i32 = arith.constant 0 : i32
    %c0_i32_0 = arith.constant 0 : i32
    %c0_i32_1 = arith.constant 0 : i32
    return %c0_i32, %c0_i32_0 : i32, i32
  }
  func.func @transform_7(%arg0: i32) -> (i32, i32) {
    %c0_i32 = arith.constant 0 : i32
    %c0_i32_0 = arith.constant 0 : i32
    %c0_i32_1 = arith.constant 0 : i32
    return %c0_i32, %c0_i32_0 : i32, i32
  }
  func.func @transform_8(%arg0: i32) -> (i32, i32) {
    %c0_i32 = arith.constant 0 : i32
    %c0_i32_0 = arith.constant 0 : i32
    %c0_i32_1 = arith.constant 0 : i32
    return %c0_i32, %c0_i32_0 : i32, i32
  }
  func.func @transform_9(%arg0: i32) -> (i32, i32) {
    %c0_i32 = arith.constant 0 : i32
    %c0_i32_0 = arith.constant 0 : i32
    %c0_i32_1 = arith.constant 0 : i32
    return %c0_i32, %c0_i32_0 : i32, i32
  }
  func.func @transform_10(%arg0: i32) -> (i32, i32) {
    %c0_i32 = arith.constant 0 : i32
    %c0_i32_0 = arith.constant 0 : i32
    return %arg0, %c0_i32 : i32, i32
  }
  func.func @transform_11(%arg0: i32) -> (i32, i32, i32) {
    %c0_i32 = arith.constant 0 : i32
    %c0_i32_0 = arith.constant 0 : i32
    %c0_i32_1 = arith.constant 0 : i32
    return %arg0, %c0_i32, %c0_i32_0 : i32, i32, i32
  }
}

</mosaic_0001>

<llo_original>
// kernel: tpu_custom_call.1
$region0: #{tpu_custom_call.1}
  #allocation0 [shape = 'u32[]', space=smem, size = 0x4, offset = 0x4, fixed_abs, tag = 'smem constant byte address 0x4 - core index']
  #allocation1 [shape = 'u32[144,128]{1,0:T(1,128)}', space=vmem, size = 0x12000, scoped, tag = 'internal scratch']
  %s0 = inlined_call_operand.hbm [shape: f32[2,8,16], index: 0, kind: input, shape index: {}]
  %s1 = inlined_call_operand.hbm [shape: f32[2,8,16], index: 1, kind: input, shape index: {}]
  %s2 = inlined_call_operand.hbm [shape: f32[2,8,16], index: 2, kind: input, shape index: {}]
  %s3 = inlined_call_operand.hbm [shape: f32[16,64], index: 3, kind: input, shape index: {}]
  %s4 = inlined_call_operand.hbm [shape: f32[16,32], index: 4, kind: input, shape index: {}]
  %s5 = inlined_call_operand.vmem [shape: f32[16,32], index: 5, kind: input, shape index: {}]
  %s6 = inlined_call_operand.hbm [shape: f32[32,32], index: 6, kind: input, shape index: {}]
  %s7 = inlined_call_operand.vmem [shape: f32[1,32], index: 7, kind: input, shape index: {}]
  %s8 = inlined_call_operand.vmem [shape: f32[1,32], index: 8, kind: input, shape index: {}]
  %s9 = inlined_call_operand.vmem [shape: f32[1,32], index: 9, kind: input, shape index: {}]
  %s10 = inlined_call_operand.hbm [shape: f32[16,32], index: 10, kind: output, shape index: {0}]
  %s11 = inlined_call_operand.hbm [shape: f32[8,8,8], index: 11, kind: output, shape index: {1}]
  %12 = xla_tuple %s10, %s11
  %s13 = sld [smem:[#allocation0]]
  $region82: #{tpu_custom_call.1} parent=0
    _
  %s15 = ssub.s32 1, %s13
  %s16 = scalar_select 0, %s15, %s13
  $region1: #{tpu_custom_call.1} parent=0
    #allocation2 [shape = 'u8[8192]{0}', space=vmem, size = 0x2000, scoped, tag = 'input window, operand 0, single buffered']
    #allocation3 [shape = 's32[1]{0}', space=sflag, size = 0x4, scoped, tag = 'scoped memory for tpu_custom_call.1']
    #allocation4 [shape = 's32[1]{0}', space=sflag, size = 0x4, scoped, tag = 'scoped memory for tpu_custom_call.1']
    #allocation5 [shape = 'u8[8192]{0}', space=vmem, size = 0x2000, scoped, tag = 'input window, operand 1, single buffered']
    #allocation6 [shape = 's32[1]{0}', space=sflag, size = 0x4, scoped, tag = 'scoped memory for tpu_custom_call.1']
    #allocation7 [shape = 'u8[8192]{0}', space=vmem, size = 0x2000, scoped, tag = 'input window, operand 2, single buffered']
    #allocation8 [shape = 'u8[8192]{0}', space=vmem, size = 0x2000, scoped, tag = 'input window, operand 3, single buffered']
    #allocation9 [shape = 's32[1]{0}', space=sflag, size = 0x4, scoped, tag = 'scoped memory for tpu_custom_call.1']
    #allocation10 [shape = 'u8[8192]{0}', space=vmem, size = 0x2000, scoped, tag = 'input window, operand 4, single buffered']
    #allocation11 [shape = 'u8[16384]{0}', space=vmem, size = 0x4000, scoped, tag = 'input window, operand 6, single buffered']
    #allocation12 [shape = 's32[1]{0}', space=sflag, size = 0x4, scoped, tag = 'scoped memory for tpu_custom_call.1']
    #allocation13 [shape = 'u8[8192]{0}', space=vmem, size = 0x2000, scoped, tag = 'output window, operand 0, single buffered']
    #allocation14 [shape = 'u8[32768]{0}', space=vmem, size = 0x8000, scoped, tag = 'output window, operand 1, single buffered']
    #allocation15 [shape = 's32[1]{0}', space=sflag, size = 0x4, scoped, tag = 'scoped memory for tpu_custom_call.1']
    %17 = vsyncpa [#allocation3], 0
    %18 = vsyncpa [#allocation6], 0
    %19 = vsyncpa [#allocation9], 0
    %20 = vsyncpa [#allocation12], 0
    %21 = vsyncpa [#allocation4], 0
    %22 = vsyncpa [#allocation15], 0
    // Predicated region
    $region2: #{tpu_custom_call.1} parent=1 // pred_check
      _
    $region3: #{tpu_custom_call.1} parent=1 // pred_check_branch
      %24 = sbr.rel (0) target = $region5
    $region4: #{tpu_custom_call.1} parent=1 // pred_region
      %s26 = ssub.s32 256, 256
      %27 = vsyncadd [#allocation3], %s26
      %s28 = sshll.u32 [#allocation2], 4
      %s29 = int_to_ptr.vmem [resolvable:$true] %s28
      %34 = dma.hbm_to_vmem [thread:$0]  %s0, 256, %s29, [#allocation3], 128, 128, 8
    $region5: #{tpu_custom_call.1} parent=1 // pred_fallthru
      _
    // Predicated region
    $region6: #{tpu_custom_call.1} parent=1 // pred_check
      _
    $region7: #{tpu_custom_call.1} parent=1 // pred_check_branch
      %36 = sbr.rel (0) target = $region9
    $region8: #{tpu_custom_call.1} parent=1 // pred_region
      %s38 = ssub.s32 256, 256
      %39 = vsyncadd [#allocation6], %s38
      %s40 = sshll.u32 [#allocation5], 4
      %s41 = int_to_ptr.vmem [resolvable:$true] %s40
      %46 = dma.hbm_to_vmem [thread:$0]  %s1, 256, %s41, [#allocation6], 128, 128, 8
    $region9: #{tpu_custom_call.1} parent=1 // pred_fallthru
      _
    // Predicated region
    $region10: #{tpu_custom_call.1} parent=1 // pred_check
      _
    $region11: #{tpu_custom_call.1} parent=1 // pred_check_branch
      %48 = sbr.rel (0) target = $region13
    $region12: #{tpu_custom_call.1} parent=1 // pred_region
      %s50 = ssub.s32 256, 256
      %51 = vsyncadd [#allocation6], %s50
      %s52 = sshll.u32 [#allocation7], 4
      %s53 = int_to_ptr.vmem [resolvable:$true] %s52
      %58 = dma.hbm_to_vmem [thread:$0]  %s2, 256, %s53, [#allocation6], 128, 128, 8
    $region13: #{tpu_custom_call.1} parent=1 // pred_fallthru
      _
    // Predicated region
    $region14: #{tpu_custom_call.1} parent=1 // pred_check
      _
    $region15: #{tpu_custom_call.1} parent=1 // pred_check_branch
      %60 = sbr.rel (0) target = $region17
    $region16: #{tpu_custom_call.1} parent=1 // pred_region
      %s62 = ssub.s32 256, 256
      %63 = vsyncadd [#allocation9], %s62
      %s64 = sshll.u32 [#allocation8], 4
      %s65 = int_to_ptr.vmem [resolvable:$true] %s64
      %70 = dma.hbm_to_vmem [thread:$0]  %s3, 256, %s65, [#allocation9], 128, 128, 8
    $region17: #{tpu_custom_call.1} parent=1 // pred_fallthru
      _
    // Predicated region
    $region18: #{tpu_custom_call.1} parent=1 // pred_check
      _
    $region19: #{tpu_custom_call.1} parent=1 // pred_check_branch
      %72 = sbr.rel (0) target = $region21
    $region20: #{tpu_custom_call.1} parent=1 // pred_region
      %s74 = ssub.s32 256, 256
      %75 = vsyncadd [#allocation9], %s74
      %s76 = sshll.u32 [#allocation10], 4
      %s77 = int_to_ptr.vmem [resolvable:$true] %s76
      %82 = dma.hbm_to_vmem [thread:$0]  %s4, 256, %s77, [#allocation9], 128, 128, 8
    $region21: #{tpu_custom_call.1} parent=1 // pred_fallthru
      _
    // Predicated region
    $region22: #{tpu_custom_call.1} parent=1 // pred_check
      _
    $region23: #{tpu_custom_call.1} parent=1 // pred_check_branch
      %84 = sbr.rel (0) target = $region25
    $region24: #{tpu_custom_call.1} parent=1 // pred_region
      _
    $region25: #{tpu_custom_call.1} parent=1 // pred_fallthru
      _
    // Predicated region
    $region26: #{tpu_custom_call.1} parent=1 // pred_check
      _
    $region27: #{tpu_custom_call.1} parent=1 // pred_check_branch
      %86 = sbr.rel (0) target = $region29
    $region28: #{tpu_custom_call.1} parent=1 // pred_region
      %s88 = ssub.s32 512, 512
      %89 = vsyncadd [#allocation12], %s88
      %s90 = sshll.u32 [#allocation11], 4
      %s91 = int_to_ptr.vmem [resolvable:$true] %s90
      %96 = dma.hbm_to_vmem [thread:$0]  %s6, 512, %s91, [#allocation12], 128, 128, 8
    $region29: #{tpu_custom_call.1} parent=1 // pred_fallthru
      _
    // Predicated region
    $region30: #{tpu_custom_call.1} parent=1 // pred_check
      _
    $region31: #{tpu_custom_call.1} parent=1 // pred_check_branch
      %98 = sbr.rel (0) target = $region33
    $region32: #{tpu_custom_call.1} parent=1 // pred_region
      _
    $region33: #{tpu_custom_call.1} parent=1 // pred_fallthru
      _
    // Predicated region
    $region34: #{tpu_custom_call.1} parent=1 // pred_check
      _
    $region35: #{tpu_custom_call.1} parent=1 // pred_check_branch
      %100 = sbr.rel (0) target = $region37
    $region36: #{tpu_custom_call.1} parent=1 // pred_region
      _
    $region37: #{tpu_custom_call.1} parent=1 // pred_fallthru
      _
    // Predicated region
    $region38: #{tpu_custom_call.1} parent=1 // pred_check
      _
    $region39: #{tpu_custom_call.1} parent=1 // pred_check_branch
      %102 = sbr.rel (0) target = $region41
    $region40: #{tpu_custom_call.1} parent=1 // pred_region
      _
    $region41: #{tpu_custom_call.1} parent=1 // pred_fallthru
      _
    // Predicated region
    $region42: #{tpu_custom_call.1} parent=1 // pred_check
      _
    $region43: #{tpu_custom_call.1} parent=1 // pred_check_branch
      %104 = sbr.rel (0) target = $region45
    $region44: #{tpu_custom_call.1} parent=1 // pred_region
      %105 = dma.done [#allocation3], 256
    $region45: #{tpu_custom_call.1} parent=1 // pred_fallthru
      _
    // Predicated region
    $region46: #{tpu_custom_call.1} parent=1 // pred_check
      _
    $region47: #{tpu_custom_call.1} parent=1 // pred_check_branch
      %107 = sbr.rel (0) target = $region49
    $region48: #{tpu_custom_call.1} parent=1 // pred_region
      %108 = dma.done [#allocation6], 256
    $region49: #{tpu_custom_call.1} parent=1 // pred_fallthru
      _
    // Predicated region
    $region50: #{tpu_custom_call.1} parent=1 // pred_check
      _
    $region51: #{tpu_custom_call.1} parent=1 // pred_check_branch
      %110 = sbr.rel (0) target = $region53
    $region52: #{tpu_custom_call.1} parent=1 // pred_region
      %111 = dma.done [#allocation6], 256
    $region53: #{tpu_custom_call.1} parent=1 // pred_fallthru
      _
    // Predicated region
    $region54: #{tpu_custom_call.1} parent=1 // pred_check
      _
    $region55: #{tpu_custom_call.1} parent=1 // pred_check_branch
      %113 = sbr.rel (0) target = $region57
    $region56: #{tpu_custom_call.1} parent=1 // pred_region
      %114 = dma.done [#allocation9], 256
    $region57: #{tpu_custom_call.1} parent=1 // pred_fallthru
      _
    // Predicated region
    $region58: #{tpu_custom_call.1} parent=1 // pred_check
      _
    $region59: #{tpu_custom_call.1} parent=1 // pred_check_branch
      %116 = sbr.rel (0) target = $region61
    $region60: #{tpu_custom_call.1} parent=1 // pred_region
      %117 = dma.done [#allocation9], 256
    $region61: #{tpu_custom_call.1} parent=1 // pred_fallthru
      _
    // Predicated region
    $region62: #{tpu_custom_call.1} parent=1 // pred_check
      _
    $region63: #{tpu_custom_call.1} parent=1 // pred_check_branch
      %119 = sbr.rel (0) target = $region65
    $region64: #{tpu_custom_call.1} parent=1 // pred_region
      %120 = dma.done [#allocation12], 512
    $region65: #{tpu_custom_call.1} parent=1 // pred_fallthru
      _
    %v121 = vld [vmem:[#allocation2] sm:$0xff]
    %v122 = vld [vmem:[#allocation2 + $0x8] sm:$0xff]
    %v123 = vld [vmem:[#allocation5] sm:$0xff]
    %v124 = vld [vmem:[#allocation5 + $0x8] sm:$0xff]
    %v125 = vld [vmem:[#allocation7] sm:$0xff]
    %v126 = vld [vmem:[#allocation7 + $0x8] sm:$0xff]
    %v127 = vld [vmem:[#allocation8] sm:$0xff]
    %v128 = vld [vmem:[#allocation8 + $0x8] sm:$0xff]
    %vm129 = vcmask 130048
    %v131 = vsel %vm129, %v121, 0
    %v134 = vsel %vm129, %v122, 0
    %136 = vmatprep.subr.mxu0 0.0
    %137 = vmatpush1.msra.mxu0 %v127
    %138 = vmatprep.subr.mxu0 0.0
    %139 = vmatpush1.msra.mxu0 %v128
    %140 = vmatprep.subr.mxu0 0.0
    %141 = vmatpush1.msra.mxu0 0.0
    %142 = vmatprep.subr.mxu0 0.0
    %143 = vmatpush1.msra.mxu0 0.0
    %144 = vmatprep.subr.mxu0 0.0
    %145 = vmatpush1.msra.mxu0 0.0
    %146 = vmatprep.subr.mxu0 0.0
    %147 = vmatpush1.msra.mxu0 0.0
    %148 = vmatprep.subr.mxu0 0.0
    %149 = vmatpush1.msra.mxu0 0.0
    %150 = vmatprep.subr.mxu0 0.0
    %151 = vmatpush1.msra.mxu0 0.0
    %152 = vmatprep.subr.mxu0 0.0
    %153 = vmatpush1.msra.mxu0 0.0
    %154 = vmatprep.subr.mxu0 0.0
    %155 = vmatpush1.msra.mxu0 0.0
    %156 = vmatprep.subr.mxu0 0.0
    %157 = vmatpush1.msra.mxu0 0.0
    %158 = vmatprep.subr.mxu0 0.0
    %159 = vmatpush1.msra.mxu0 0.0
    %160 = vmatprep.subr.mxu0 0.0
    %161 = vmatpush1.msra.mxu0 0.0
    %162 = vmatprep.subr.mxu0 0.0
    %163 = vmatpush1.msra.mxu0 0.0
    %164 = vmatprep.subr.mxu0 0.0
    %165 = vmatpush1.msra.mxu0 0.0
    %166 = vmatprep.subr.mxu0 0.0
    %167 = vmatpush1.msra.mxu0 0.0
    %168 = vmatprep.subr.mxu0 0.0
    %169 = vmatpush1.msra.mxu0 0.0
    %170 = vmatprep.subr.mxu0 0.0
    %171 = vmatpush1.msra.mxu0 0.0
    %172 = vmatprep.subr.mxu0 0.0
    %173 = vmatpush1.msra.mxu0 0.0
    %174 = vmatprep.subr.mxu0 0.0
    %175 = vmatpush1.msra.mxu0 0.0
    %176 = vmatprep.subr.mxu0 0.0
    %177 = vmatpush1.msra.mxu0 0.0
    %178 = vmatprep.subr.mxu0 0.0
    %179 = vmatpush1.msra.mxu0 0.0
    %180 = vmatprep.subr.mxu0 0.0
    %181 = vmatpush1.msra.mxu0 0.0
    %182 = vmatprep.subr.mxu0 0.0
    %183 = vmatpush1.msra.mxu0 0.0
    %184 = vmatprep.subr.mxu0 0.0
    %185 = vmatpush1.msra.mxu0 0.0
    %186 = vmatprep.subr.mxu0 0.0
    %187 = vmatpush1.msra.mxu0 0.0
    %188 = vmatprep.subr.mxu0 0.0
    %189 = vmatpush1.msra.mxu0 0.0
    %190 = vmatprep.subr.mxu0 0.0
    %191 = vmatpush1.msra.mxu0 0.0
    %192 = vmatprep.subr.mxu0 0.0
    %193 = vmatpush1.msra.mxu0 0.0
    %194 = vmatprep.subr.mxu0 0.0
    %195 = vmatpush1.msra.mxu0 0.0
    %196 = vmatprep.subr.mxu0 0.0
    %197 = vmatpush1.msra.mxu0 0.0
    %198 = vmatprep.subr.mxu0 0.0
    %199 = vmatpush1.msra.mxu0 0.0
    %200 = vmatprep.mubr.f32.mxu0 0.0
    %201 = vmatmul.mubr.f32.gmra.mrb[0].mxu0 %v131
    %v202 = vpop.f32.mrb[0].mxu0
    %v203 = vadd.f32 0.0, %v202
    %v204 = vpop.f32.mrb[0].mxu0
    %205 = vmatprep.mubr.f32.mxu0 0.0
    %206 = vmatmul.mubr.f32.gmra.mrb[0].mxu0 %v134
    %v207 = vpop.f32.mrb[0].mxu0
    %v208 = vadd.f32 0.0, %v207
    %v209 = vpop.f32.mrb[0].mxu0
    %210 = vdwg.mxu0
    %v211 = vld [vmem:[%s7] sm:$0x1]
    %v213 = vlaneseq
    %v214 = vshrl.u32 %v213, 7
    %v215 = vsub.s32 0, %v214
    %v216 = vrot.slane %v211, %v215
    %217 = vrot.lane.b32.xlu0 %v216, 32
    %v218 = vpop.permute.xlu0 %217
    %v220 = vadd.f32 %v203, %v218
    %v221 = vadd.f32 %v208, %v218
    %v222 = vld [vmem:[#allocation10] sm:$0xff]
    %v223 = vld [vmem:[#allocation10 + $0x8] sm:$0xff]
    %v225 = vsel %vm129, %v123, 0
    %v228 = vsel %vm129, %v124, 0
    %230 = vmatprep.subr.mxu0 0.0
    %231 = vmatpush1.msra.mxu0 %v222
    %232 = vmatprep.subr.mxu0 0.0
    %233 = vmatpush1.msra.mxu0 %v223
    %234 = vmatprep.subr.mxu0 0.0
    %235 = vmatpush1.msra.mxu0 0.0
    %236 = vmatprep.subr.mxu0 0.0
    %237 = vmatpush1.msra.mxu0 0.0
    %238 = vmatprep.subr.mxu0 0.0
    %239 = vmatpush1.msra.mxu0 0.0
    %240 = vmatprep.subr.mxu0 0.0
    %241 = vmatpush1.msra.mxu0 0.0
    %242 = vmatprep.subr.mxu0 0.0
    %243 = vmatpush1.msra.mxu0 0.0
    %244 = vmatprep.subr.mxu0 0.0
    %245 = vmatpush1.msra.mxu0 0.0
    %246 = vmatprep.subr.mxu0 0.0
    %247 = vmatpush1.msra.mxu0 0.0
    %248 = vmatprep.subr.mxu0 0.0
    %249 = vmatpush1.msra.mxu0 0.0
    %250 = vmatprep.subr.mxu0 0.0
    %251 = vmatpush1.msra.mxu0 0.0
    %252 = vmatprep.subr.mxu0 0.0
    %253 = vmatpush1.msra.mxu0 0.0
    %254 = vmatprep.subr.mxu0 0.0
    %255 = vmatpush1.msra.mxu0 0.0
    %256 = vmatprep.subr.mxu0 0.0
    %257 = vmatpush1.msra.mxu0 0.0
    %258 = vmatprep.subr.mxu0 0.0
    %259 = vmatpush1.msra.mxu0 0.0
    %260 = vmatprep.subr.mxu0 0.0
    %261 = vmatpush1.msra.mxu0 0.0
    %262 = vmatprep.subr.mxu0 0.0
    %263 = vmatpush1.msra.mxu0 0.0
    %264 = vmatprep.subr.mxu0 0.0
    %265 = vmatpush1.msra.mxu0 0.0
    %266 = vmatprep.subr.mxu0 0.0
    %267 = vmatpush1.msra.mxu0 0.0
    %268 = vmatprep.subr.mxu0 0.0
    %269 = vmatpush1.msra.mxu0 0.0
    %270 = vmatprep.subr.mxu0 0.0
    %271 = vmatpush1.msra.mxu0 0.0
    %272 = vmatprep.subr.mxu0 0.0
    %273 = vmatpush1.msra.mxu0 0.0
    %274 = vmatprep.subr.mxu0 0.0
    %275 = vmatpush1.msra.mxu0 0.0
    %276 = vmatprep.subr.mxu0 0.0
    %277 = vmatpush1.msra.mxu0 0.0
    %278 = vmatprep.subr.mxu0 0.0
    %279 = vmatpush1.msra.mxu0 0.0
    %280 = vmatprep.subr.mxu0 0.0
    %281 = vmatpush1.msra.mxu0 0.0
    %282 = vmatprep.subr.mxu0 0.0
    %283 = vmatpush1.msra.mxu0 0.0
    %284 = vmatprep.subr.mxu0 0.0
    %285 = vmatpush1.msra.mxu0 0.0
    %286 = vmatprep.subr.mxu0 0.0
    %287 = vmatpush1.msra.mxu0 0.0
    %288 = vmatprep.subr.mxu0 0.0
    %289 = vmatpush1.msra.mxu0 0.0
    %290 = vmatprep.subr.mxu0 0.0
    %291 = vmatpush1.msra.mxu0 0.0
    %292 = vmatprep.subr.mxu0 0.0
    %293 = vmatpush1.msra.mxu0 0.0
    %294 = vmatprep.mubr.f32.mxu0 0.0
    %295 = vmatmul.mubr.f32.gmra.mrb[0].mxu0 %v225
    %v296 = vpop.f32.mrb[0].mxu0
    %v297 = vadd.f32 0.0, %v296
    %v298 = vpop.f32.mrb[0].mxu0
    %299 = vmatprep.mubr.f32.mxu0 0.0
    %300 = vmatmul.mubr.f32.gmra.mrb[0].mxu0 %v228
    %v301 = vpop.f32.mrb[0].mxu0
    %v302 = vadd.f32 0.0, %v301
    %v303 = vpop.f32.mrb[0].mxu0
    %304 = vdwg.mxu0
    %v305 = vld [vmem:[%s5] sm:$0xff]
    %v306 = vld [vmem:[%s5 + $0x8] sm:$0xff]
    %v308 = vsel %vm129, %v125, 0
    %v311 = vsel %vm129, %v126, 0
    %313 = vmatprep.subr.mxu0 0.0
    %314 = vmatpush1.msra.mxu0 %v305
    %315 = vmatprep.subr.mxu0 0.0
    %316 = vmatpush1.msra.mxu0 %v306
    %317 = vmatprep.subr.mxu0 0.0
    %318 = vmatpush1.msra.mxu0 0.0
    %319 = vmatprep.subr.mxu0 0.0
    %320 = vmatpush1.msra.mxu0 0.0
    %321 = vmatprep.subr.mxu0 0.0
    %322 = vmatpush1.msra.mxu0 0.0
    %323 = vmatprep.subr.mxu0 0.0
    %324 = vmatpush1.msra.mxu0 0.0
    %325 = vmatprep.subr.mxu0 0.0
    %326 = vmatpush1.msra.mxu0 0.0
    %327 = vmatprep.subr.mxu0 0.0
    %328 = vmatpush1.msra.mxu0 0.0
    %329 = vmatprep.subr.mxu0 0.0
    %330 = vmatpush1.msra.mxu0 0.0
    %331 = vmatprep.subr.mxu0 0.0
    %332 = vmatpush1.msra.mxu0 0.0
    %333 = vmatprep.subr.mxu0 0.0
    %334 = vmatpush1.msra.mxu0 0.0
    %335 = vmatprep.subr.mxu0 0.0
    %336 = vmatpush1.msra.mxu0 0.0
    %337 = vmatprep.subr.mxu0 0.0
    %338 = vmatpush1.msra.mxu0 0.0
    %339 = vmatprep.subr.mxu0 0.0
    %340 = vmatpush1.msra.mxu0 0.0
    %341 = vmatprep.subr.mxu0 0.0
    %342 = vmatpush1.msra.mxu0 0.0
    %343 = vmatprep.subr.mxu0 0.0
    %344 = vmatpush1.msra.mxu0 0.0
    %345 = vmatprep.subr.mxu0 0.0
    %346 = vmatpush1.msra.mxu0 0.0
    %347 = vmatprep.subr.mxu0 0.0
    %348 = vmatpush1.msra.mxu0 0.0
    %349 = vmatprep.subr.mxu0 0.0
    %350 = vmatpush1.msra.mxu0 0.0
    %351 = vmatprep.subr.mxu0 0.0
    %352 = vmatpush1.msra.mxu0 0.0
    %353 = vmatprep.subr.mxu0 0.0
    %354 = vmatpush1.msra.mxu0 0.0
    %355 = vmatprep.subr.mxu0 0.0
    %356 = vmatpush1.msra.mxu0 0.0
    %357 = vmatprep.subr.mxu0 0.0
    %358 = vmatpush1.msra.mxu0 0.0
    %359 = vmatprep.subr.mxu0 0.0
    %360 = vmatpush1.msra.mxu0 0.0
    %361 = vmatprep.subr.mxu0 0.0
    %362 = vmatpush1.msra.mxu0 0.0
    %363 = vmatprep.subr.mxu0 0.0
    %364 = vmatpush1.msra.mxu0 0.0
    %365 = vmatprep.subr.mxu0 0.0
    %366 = vmatpush1.msra.mxu0 0.0
    %367 = vmatprep.subr.mxu0 0.0
    %368 = vmatpush1.msra.mxu0 0.0
    %369 = vmatprep.subr.mxu0 0.0
    %370 = vmatpush1.msra.mxu0 0.0
    %371 = vmatprep.subr.mxu0 0.0
    %372 = vmatpush1.msra.mxu0 0.0
    %373 = vmatprep.subr.mxu0 0.0
    %374 = vmatpush1.msra.mxu0 0.0
    %375 = vmatprep.subr.mxu0 0.0
    %376 = vmatpush1.msra.mxu0 0.0
    %377 = vmatprep.mubr.f32.mxu0 0.0
    %378 = vmatmul.mubr.f32.gmra.mrb[0].mxu0 %v308
    %v379 = vpop.f32.mrb[0].mxu0
    %v380 = vadd.f32 0.0, %v379
    %v381 = vpop.f32.mrb[0].mxu0
    %382 = vmatprep.mubr.f32.mxu0 0.0
    %383 = vmatmul.mubr.f32.gmra.mrb[0].mxu0 %v311
    %v384 = vpop.f32.mrb[0].mxu0
    %v385 = vadd.f32 0.0, %v384
    %v386 = vpop.f32.mrb[0].mxu0
    %387 = vdwg.mxu0
    %390 = vrot.lane.b32.xlu0 %v203, 120
    %v391 = vpop.permute.xlu0 %390
    %392 = vrot.lane.b32.xlu0 %v208, 120
    %v393 = vpop.permute.xlu0 %392
    %394 = vrot.lane.b32.xlu0 %v203, 112
    %v395 = vpop.permute.xlu0 %394
    %396 = vrot.lane.b32.xlu0 %v208, 112
    %v397 = vpop.permute.xlu0 %396
    %398 = vrot.lane.b32.xlu0 %v203, 104
    %v399 = vpop.permute.xlu0 %398
    %400 = vrot.lane.b32.xlu0 %v208, 104
    %v401 = vpop.permute.xlu0 %400
    %404 = vrot.lane.b32.xlu0 %v297, 120
    %v405 = vpop.permute.xlu0 %404
    %406 = vrot.lane.b32.xlu0 %v302, 120
    %v407 = vpop.permute.xlu0 %406
    %408 = vrot.lane.b32.xlu0 %v297, 112
    %v409 = vpop.permute.xlu0 %408
    %410 = vrot.lane.b32.xlu0 %v302, 112
    %v411 = vpop.permute.xlu0 %410
    %412 = vrot.lane.b32.xlu0 %v297, 104
    %v413 = vpop.permute.xlu0 %412
    %414 = vrot.lane.b32.xlu0 %v302, 104
    %v415 = vpop.permute.xlu0 %414
    %418 = vrot.lane.b32.xlu0 %v380, 120
    %v419 = vpop.permute.xlu0 %418
    %420 = vrot.lane.b32.xlu0 %v385, 120
    %v421 = vpop.permute.xlu0 %420
    %424 = vrot.lane.b32.xlu0 %v380, 112
    %v425 = vpop.permute.xlu0 %424
    %426 = vrot.lane.b32.xlu0 %v385, 112
    %v427 = vpop.permute.xlu0 %426
    %430 = vrot.lane.b32.xlu0 %v380, 104
    %v431 = vpop.permute.xlu0 %430
    %432 = vrot.lane.b32.xlu0 %v385, 104
    %v433 = vpop.permute.xlu0 %432
    %vm436 = vcmask 64512
    %v437 = vsel %vm436, %v203, 0
    %v439 = vsel %vm436, %v297, 0
    %441 = vmatprep.subr.mxu0 0.0
    %442 = vmatpush1.xpose.msra.mxu0 %v439
    %443 = vmatprep.subr.mxu0 0.0
    %444 = vmatpush1.xpose.msra.mxu0 0.0
    %445 = vmatprep.subr.mxu0 0.0
    %446 = vmatpush1.xpose.msra.mxu0 0.0
    %447 = vmatprep.subr.mxu0 0.0
    %448 = vmatpush1.xpose.msra.mxu0 0.0
    %449 = vmatprep.subr.mxu0 0.0
    %450 = vmatpush1.xpose.msra.mxu0 0.0
    %451 = vmatprep.subr.mxu0 0.0
    %452 = vmatpush1.xpose.msra.mxu0 0.0
    %453 = vmatprep.subr.mxu0 0.0
    %454 = vmatpush1.xpose.msra.mxu0 0.0
    %455 = vmatprep.subr.mxu0 0.0
    %456 = vmatpush1.xpose.msra.mxu0 0.0
    %457 = vmatprep.subr.mxu0 0.0
    %458 = vmatpush1.xpose.msra.mxu0 0.0
    %459 = vmatprep.subr.mxu0 0.0
    %460 = vmatpush1.xpose.msra.mxu0 0.0
    %461 = vmatprep.subr.mxu0 0.0
    %462 = vmatpush1.xpose.msra.mxu0 0.0
    %463 = vmatprep.subr.mxu0 0.0
    %464 = vmatpush1.xpose.msra.mxu0 0.0
    %465 = vmatprep.subr.mxu0 0.0
    %466 = vmatpush1.xpose.msra.mxu0 0.0
    %467 = vmatprep.subr.mxu0 0.0
    %468 = vmatpush1.xpose.msra.mxu0 0.0
    %469 = vmatprep.subr.mxu0 0.0
    %470 = vmatpush1.xpose.msra.mxu0 0.0
    %471 = vmatprep.subr.mxu0 0.0
    %472 = vmatpush1.xpose.msra.mxu0 0.0
    %473 = vmatprep.subr.mxu0 0.0
    %474 = vmatpush1.xpose.msra.mxu0 0.0
    %475 = vmatprep.subr.mxu0 0.0
    %476 = vmatpush1.xpose.msra.mxu0 0.0
    %477 = vmatprep.subr.mxu0 0.0
    %478 = vmatpush1.xpose.msra.mxu0 0.0
    %479 = vmatprep.subr.mxu0 0.0
    %480 = vmatpush1.xpose.msra.mxu0 0.0
    %481 = vmatprep.subr.mxu0 0.0
    %482 = vmatpush1.xpose.msra.mxu0 0.0
    %483 = vmatprep.subr.mxu0 0.0
    %484 = vmatpush1.xpose.msra.mxu0 0.0
    %485 = vmatprep.subr.mxu0 0.0
    %486 = vmatpush1.xpose.msra.mxu0 0.0
    %487 = vmatprep.subr.mxu0 0.0
    %488 = vmatpush1.xpose.msra.mxu0 0.0
    %489 = vmatprep.subr.mxu0 0.0
    %490 = vmatpush1.xpose.msra.mxu0 0.0
    %491 = vmatprep.subr.mxu0 0.0
    %492 = vmatpush1.xpose.msra.mxu0 0.0
    %493 = vmatprep.subr.mxu0 0.0
    %494 = vmatpush1.xpose.msra.mxu0 0.0
    %495 = vmatprep.subr.mxu0 0.0
    %496 = vmatpush1.xpose.msra.mxu0 0.0
    %497 = vmatprep.subr.mxu0 0.0
    %498 = vmatpush1.xpose.msra.mxu0 0.0
    %499 = vmatprep.subr.mxu0 0.0
    %500 = vmatpush1.xpose.msra.mxu0 0.0
    %501 = vmatprep.subr.mxu0 0.0
    %502 = vmatpush1.xpose.msra.mxu0 0.0
    %503 = vmatprep.subr.mxu0 0.0
    %504 = vmatpush1.xpose.msra.mxu0 0.0
    %505 = vmatprep.mubr.f32.mxu0 0.0
    %506 = vmatmul.mubr.f32.gmra.mrb[0].mxu0 %v437
    %v507 = vpop.f32.mrb[0].mxu0
    %v508 = vadd.f32 0.0, %v507
    %v509 = vpop.f32.mrb[0].mxu0
    %510 = vdwg.mxu0
    %v511 = vsel %vm436, %v208, 0
    %v513 = vsel %vm436, %v302, 0
    %515 = vmatprep.subr.mxu0 0.0
    %516 = vmatpush1.xpose.msra.mxu0 %v513
    %517 = vmatprep.subr.mxu0 0.0
    %518 = vmatpush1.xpose.msra.mxu0 0.0
    %519 = vmatprep.subr.mxu0 0.0
    %520 = vmatpush1.xpose.msra.mxu0 0.0
    %521 = vmatprep.subr.mxu0 0.0
    %522 = vmatpush1.xpose.msra.mxu0 0.0
    %523 = vmatprep.subr.mxu0 0.0
    %524 = vmatpush1.xpose.msra.mxu0 0.0
    %525 = vmatprep.subr.mxu0 0.0
    %526 = vmatpush1.xpose.msra.mxu0 0.0
    %527 = vmatprep.subr.mxu0 0.0
    %528 = vmatpush1.xpose.msra.mxu0 0.0
    %529 = vmatprep.subr.mxu0 0.0
    %530 = vmatpush1.xpose.msra.mxu0 0.0
    %531 = vmatprep.subr.mxu0 0.0
    %532 = vmatpush1.xpose.msra.mxu0 0.0
    %533 = vmatprep.subr.mxu0 0.0
    %534 = vmatpush1.xpose.msra.mxu0 0.0
    %535 = vmatprep.subr.mxu0 0.0
    %536 = vmatpush1.xpose.msra.mxu0 0.0
    %537 = vmatprep.subr.mxu0 0.0
    %538 = vmatpush1.xpose.msra.mxu0 0.0
    %539 = vmatprep.subr.mxu0 0.0
    %540 = vmatpush1.xpose.msra.mxu0 0.0
    %541 = vmatprep.subr.mxu0 0.0
    %542 = vmatpush1.xpose.msra.mxu0 0.0
    %543 = vmatprep.subr.mxu0 0.0
    %544 = vmatpush1.xpose.msra.mxu0 0.0
    %545 = vmatprep.subr.mxu0 0.0
    %546 = vmatpush1.xpose.msra.mxu0 0.0
    %547 = vmatprep.subr.mxu0 0.0
    %548 = vmatpush1.xpose.msra.mxu0 0.0
    %549 = vmatprep.subr.mxu0 0.0
    %550 = vmatpush1.xpose.msra.mxu0 0.0
    %551 = vmatprep.subr.mxu0 0.0
    %552 = vmatpush1.xpose.msra.mxu0 0.0
    %553 = vmatprep.subr.mxu0 0.0
    %554 = vmatpush1.xpose.msra.mxu0 0.0
    %555 = vmatprep.subr.mxu0 0.0
    %556 = vmatpush1.xpose.msra.mxu0 0.0
    %557 = vmatprep.subr.mxu0 0.0
    %558 = vmatpush1.xpose.msra.mxu0 0.0
    %559 = vmatprep.subr.mxu0 0.0
    %560 = vmatpush1.xpose.msra.mxu0 0.0
    %561 = vmatprep.subr.mxu0 0.0
    %562 = vmatpush1.xpose.msra.mxu0 0.0
    %563 = vmatprep.subr.mxu0 0.0
    %564 = vmatpush1.xpose.msra.mxu0 0.0
    %565 = vmatprep.subr.mxu0 0.0
    %566 = vmatpush1.xpose.msra.mxu0 0.0
    %567 = vmatprep.subr.mxu0 0.0
    %568 = vmatpush1.xpose.msra.mxu0 0.0
    %569 = vmatprep.subr.mxu0 0.0
    %570 = vmatpush1.xpose.msra.mxu0 0.0
    %571 = vmatprep.subr.mxu0 0.0
    %572 = vmatpush1.xpose.msra.mxu0 0.0
    %573 = vmatprep.subr.mxu0 0.0
    %574 = vmatpush1.xpose.msra.mxu0 0.0
    %575 = vmatprep.subr.mxu0 0.0
    %576 = vmatpush1.xpose.msra.mxu0 0.0
    %577 = vmatprep.subr.mxu0 0.0
    %578 = vmatpush1.xpose.msra.mxu0 0.0
    %579 = vmatprep.mubr.f32.mxu0 0.0
    %580 = vmatmul.mubr.f32.gmra.mrb[0].mxu0 %v511
    %v581 = vpop.f32.mrb[0].mxu0
    %v582 = vadd.f32 0.0, %v581
    %v583 = vpop.f32.mrb[0].mxu0
    %584 = vdwg.mxu0
    %v585 = vsel %vm436, %v391, 0
    %v587 = vsel %vm436, %v405, 0
    %589 = vmatprep.subr.mxu0 0.0
    %590 = vmatpush1.xpose.msra.mxu0 %v587
    %591 = vmatprep.subr.mxu0 0.0
    %592 = vmatpush1.xpose.msra.mxu0 0.0
    %593 = vmatprep.subr.mxu0 0.0
    %594 = vmatpush1.xpose.msra.mxu0 0.0
    %595 = vmatprep.subr.mxu0 0.0
    %596 = vmatpush1.xpose.msra.mxu0 0.0
    %597 = vmatprep.subr.mxu0 0.0
    %598 = vmatpush1.xpose.msra.mxu0 0.0
    %599 = vmatprep.subr.mxu0 0.0
    %600 = vmatpush1.xpose.msra.mxu0 0.0
    %601 = vmatprep.subr.mxu0 0.0
    %602 = vmatpush1.xpose.msra.mxu0 0.0
    %603 = vmatprep.subr.mxu0 0.0
    %604 = vmatpush1.xpose.msra.mxu0 0.0
    %605 = vmatprep.subr.mxu0 0.0
    %606 = vmatpush1.xpose.msra.mxu0 0.0
    %607 = vmatprep.subr.mxu0 0.0
    %608 = vmatpush1.xpose.msra.mxu0 0.0
    %609 = vmatprep.subr.mxu0 0.0
    %610 = vmatpush1.xpose.msra.mxu0 0.0
    %611 = vmatprep.subr.mxu0 0.0
    %612 = vmatpush1.xpose.msra.mxu0 0.0
    %613 = vmatprep.subr.mxu0 0.0
    %614 = vmatpush1.xpose.msra.mxu0 0.0
    %615 = vmatprep.subr.mxu0 0.0
    %616 = vmatpush1.xpose.msra.mxu0 0.0
    %617 = vmatprep.subr.mxu0 0.0
    %618 = vmatpush1.xpose.msra.mxu0 0.0
    %619 = vmatprep.subr.mxu0 0.0
    %620 = vmatpush1.xpose.msra.mxu0 0.0
    %621 = vmatprep.subr.mxu0 0.0
    %622 = vmatpush1.xpose.msra.mxu0 0.0
    %623 = vmatprep.subr.mxu0 0.0
    %624 = vmatpush1.xpose.msra.mxu0 0.0
    %625 = vmatprep.subr.mxu0 0.0
    %626 = vmatpush1.xpose.msra.mxu0 0.0
    %627 = vmatprep.subr.mxu0 0.0
    %628 = vmatpush1.xpose.msra.mxu0 0.0
    %629 = vmatprep.subr.mxu0 0.0
    %630 = vmatpush1.xpose.msra.mxu0 0.0
    %631 = vmatprep.subr.mxu0 0.0
    %632 = vmatpush1.xpose.msra.mxu0 0.0
    %633 = vmatprep.subr.mxu0 0.0
    %634 = vmatpush1.xpose.msra.mxu0 0.0
    %635 = vmatprep.subr.mxu0 0.0
    %636 = vmatpush1.xpose.msra.mxu0 0.0
    %637 = vmatprep.subr.mxu0 0.0
    %638 = vmatpush1.xpose.msra.mxu0 0.0
    %639 = vmatprep.subr.mxu0 0.0
    %640 = vmatpush1.xpose.msra.mxu0 0.0
    %641 = vmatprep.subr.mxu0 0.0
    %642 = vmatpush1.xpose.msra.mxu0 0.0
    %643 = vmatprep.subr.mxu0 0.0
    %644 = vmatpush1.xpose.msra.mxu0 0.0
    %645 = vmatprep.subr.mxu0 0.0
    %646 = vmatpush1.xpose.msra.mxu0 0.0
    %647 = vmatprep.subr.mxu0 0.0
    %648 = vmatpush1.xpose.msra.mxu0 0.0
    %649 = vmatprep.subr.mxu0 0.0
    %650 = vmatpush1.xpose.msra.mxu0 0.0
    %651 = vmatprep.subr.mxu0 0.0
    %652 = vmatpush1.xpose.msra.mxu0 0.0
    %653 = vmatprep.mubr.f32.mxu0 0.0
    %654 = vmatmul.mubr.f32.gmra.mrb[0].mxu0 %v585
    %v655 = vpop.f32.mrb[0].mxu0
    %v656 = vadd.f32 0.0, %v655
    %v657 = vpop.f32.mrb[0].mxu0
    %658 = vdwg.mxu0
    %v659 = vsel %vm436, %v393, 0
    %v661 = vsel %vm436, %v407, 0
    %663 = vmatprep.subr.mxu0 0.0
    %664 = vmatpush1.xpose.msra.mxu0 %v661
    %665 = vmatprep.subr.mxu0 0.0
    %666 = vmatpush1.xpose.msra.mxu0 0.0
    %667 = vmatprep.subr.mxu0 0.0
    %668 = vmatpush1.xpose.msra.mxu0 0.0
    %669 = vmatprep.subr.mxu0 0.0
    %670 = vmatpush1.xpose.msra.mxu0 0.0
    %671 = vmatprep.subr.mxu0 0.0
    %672 = vmatpush1.xpose.msra.mxu0 0.0
    %673 = vmatprep.subr.mxu0 0.0
    %674 = vmatpush1.xpose.msra.mxu0 0.0
    %675 = vmatprep.subr.mxu0 0.0
    %676 = vmatpush1.xpose.msra.mxu0 0.0
    %677 = vmatprep.subr.mxu0 0.0
    %678 = vmatpush1.xpose.msra.mxu0 0.0
    %679 = vmatprep.subr.mxu0 0.0
    %680 = vmatpush1.xpose.msra.mxu0 0.0
    %681 = vmatprep.subr.mxu0 0.0
    %682 = vmatpush1.xpose.msra.mxu0 0.0
    %683 = vmatprep.subr.mxu0 0.0
    %684 = vmatpush1.xpose.msra.mxu0 0.0
    %685 = vmatprep.subr.mxu0 0.0
    %686 = vmatpush1.xpose.msra.mxu0 0.0
    %687 = vmatprep.subr.mxu0 0.0
    %688 = vmatpush1.xpose.msra.mxu0 0.0
    %689 = vmatprep.subr.mxu0 0.0
    %690 = vmatpush1.xpose.msra.mxu0 0.0
    %691 = vmatprep.subr.mxu0 0.0
    %692 = vmatpush1.xpose.msra.mxu0 0.0
    %693 = vmatprep.subr.mxu0 0.0
    %694 = vmatpush1.xpose.msra.mxu0 0.0
    %695 = vmatprep.subr.mxu0 0.0
    %696 = vmatpush1.xpose.msra.mxu0 0.0
    %697 = vmatprep.subr.mxu0 0.0
    %698 = vmatpush1.xpose.msra.mxu0 0.0
    %699 = vmatprep.subr.mxu0 0.0
    %700 = vmatpush1.xpose.msra.mxu0 0.0
    %701 = vmatprep.subr.mxu0 0.0
    %702 = vmatpush1.xpose.msra.mxu0 0.0
    %703 = vmatprep.subr.mxu0 0.0
    %704 = vmatpush1.xpose.msra.mxu0 0.0
    %705 = vmatprep.subr.mxu0 0.0
    %706 = vmatpush1.xpose.msra.mxu0 0.0
    %707 = vmatprep.subr.mxu0 0.0
    %708 = vmatpush1.xpose.msra.mxu0 0.0
    %709 = vmatprep.subr.mxu0 0.0
    %710 = vmatpush1.xpose.msra.mxu0 0.0
    %711 = vmatprep.subr.mxu0 0.0
    %712 = vmatpush1.xpose.msra.mxu0 0.0
    %713 = vmatprep.subr.mxu0 0.0
    %714 = vmatpush1.xpose.msra.mxu0 0.0
    %715 = vmatprep.subr.mxu0 0.0
    %716 = vmatpush1.xpose.msra.mxu0 0.0
    %717 = vmatprep.subr.mxu0 0.0
    %718 = vmatpush1.xpose.msra.mxu0 0.0
    %719 = vmatprep.subr.mxu0 0.0
    %720 = vmatpush1.xpose.msra.mxu0 0.0
    %721 = vmatprep.subr.mxu0 0.0
    %722 = vmatpush1.xpose.msra.mxu0 0.0
    %723 = vmatprep.subr.mxu0 0.0
    %724 = vmatpush1.xpose.msra.mxu0 0.0
    %725 = vmatprep.subr.mxu0 0.0
    %726 = vmatpush1.xpose.msra.mxu0 0.0
    %727 = vmatprep.mubr.f32.mxu0 0.0
    %728 = vmatmul.mubr.f32.gmra.mrb[0].mxu0 %v659
    %v729 = vpop.f32.mrb[0].mxu0
    %v730 = vadd.f32 0.0, %v729
    %v731 = vpop.f32.mrb[0].mxu0
    %732 = vdwg.mxu0
    %v733 = vsel %vm436, %v395, 0
    %v735 = vsel %vm436, %v409, 0
    %737 = vmatprep.subr.mxu0 0.0
    %738 = vmatpush1.xpose.msra.mxu0 %v735
    %739 = vmatprep.subr.mxu0 0.0
    %740 = vmatpush1.xpose.msra.mxu0 0.0
    %741 = vmatprep.subr.mxu0 0.0
    %742 = vmatpush1.xpose.msra.mxu0 0.0
    %743 = vmatprep.subr.mxu0 0.0
    %744 = vmatpush1.xpose.msra.mxu0 0.0
    %745 = vmatprep.subr.mxu0 0.0
    %746 = vmatpush1.xpose.msra.mxu0 0.0
    %747 = vmatprep.subr.mxu0 0.0
    %748 = vmatpush1.xpose.msra.mxu0 0.0
    %749 = vmatprep.subr.mxu0 0.0
    %750 = vmatpush1.xpose.msra.mxu0 0.0
    %751 = vmatprep.subr.mxu0 0.0
    %752 = vmatpush1.xpose.msra.mxu0 0.0
    %753 = vmatprep.subr.mxu0 0.0
    %754 = vmatpush1.xpose.msra.mxu0 0.0
    %755 = vmatprep.subr.mxu0 0.0
    %756 = vmatpush1.xpose.msra.mxu0 0.0
    %757 = vmatprep.subr.mxu0 0.0
    %758 = vmatpush1.xpose.msra.mxu0 0.0
    %759 = vmatprep.subr.mxu0 0.0
    %760 = vmatpush1.xpose.msra.mxu0 0.0
    %761 = vmatprep.subr.mxu0 0.0
    %762 = vmatpush1.xpose.msra.mxu0 0.0
    %763 = vmatprep.subr.mxu0 0.0
    %764 = vmatpush1.xpose.msra.mxu0 0.0
    %765 = vmatprep.subr.mxu0 0.0
    %766 = vmatpush1.xpose.msra.mxu0 0.0
    %767 = vmatprep.subr.mxu0 0.0
    %768 = vmatpush1.xpose.msra.mxu0 0.0
    %769 = vmatprep.subr.mxu0 0.0
    %770 = vmatpush1.xpose.msra.mxu0 0.0
    %771 = vmatprep.subr.mxu0 0.0
    %772 = vmatpush1.xpose.msra.mxu0 0.0
    %773 = vmatprep.subr.mxu0 0.0
    %774 = vmatpush1.xpose.msra.mxu0 0.0
    %775 = vmatprep.subr.mxu0 0.0
    %776 = vmatpush1.xpose.msra.mxu0 0.0
    %777 = vmatprep.subr.mxu0 0.0
    %778 = vmatpush1.xpose.msra.mxu0 0.0
    %779 = vmatprep.subr.mxu0 0.0
    %780 = vmatpush1.xpose.msra.mxu0 0.0
    %781 = vmatprep.subr.mxu0 0.0
    %782 = vmatpush1.xpose.msra.mxu0 0.0
    %783 = vmatprep.subr.mxu0 0.0
    %784 = vmatpush1.xpose.msra.mxu0 0.0
    %785 = vmatprep.subr.mxu0 0.0
    %786 = vmatpush1.xpose.msra.mxu0 0.0
    %787 = vmatprep.subr.mxu0 0.0
    %788 = vmatpush1.xpose.msra.mxu0 0.0
    %789 = vmatprep.subr.mxu0 0.0
    %790 = vmatpush1.xpose.msra.mxu0 0.0
    %791 = vmatprep.subr.mxu0 0.0
    %792 = vmatpush1.xpose.msra.mxu0 0.0
    %793 = vmatprep.subr.mxu0 0.0
    %794 = vmatpush1.xpose.msra.mxu0 0.0
    %795 = vmatprep.subr.mxu0 0.0
    %796 = vmatpush1.xpose.msra.mxu0 0.0
    %797 = vmatprep.subr.mxu0 0.0
    %798 = vmatpush1.xpose.msra.mxu0 0.0
    %799 = vmatprep.subr.mxu0 0.0
    %800 = vmatpush1.xpose.msra.mxu0 0.0
    %801 = vmatprep.mubr.f32.mxu0 0.0
    %802 = vmatmul.mubr.f32.gmra.mrb[0].mxu0 %v733
    %v803 = vpop.f32.mrb[0].mxu0
    %v804 = vadd.f32 0.0, %v803
    %v805 = vpop.f32.mrb[0].mxu0
    %806 = vdwg.mxu0
    %v807 = vsel %vm436, %v397, 0
    %v809 = vsel %vm436, %v411, 0
    %811 = vmatprep.subr.mxu0 0.0
    %812 = vmatpush1.xpose.msra.mxu0 %v809
    %813 = vmatprep.subr.mxu0 0.0
    %814 = vmatpush1.xpose.msra.mxu0 0.0
    %815 = vmatprep.subr.mxu0 0.0
    %816 = vmatpush1.xpose.msra.mxu0 0.0
    %817 = vmatprep.subr.mxu0 0.0
    %818 = vmatpush1.xpose.msra.mxu0 0.0
    %819 = vmatprep.subr.mxu0 0.0
    %820 = vmatpush1.xpose.msra.mxu0 0.0
    %821 = vmatprep.subr.mxu0 0.0
    %822 = vmatpush1.xpose.msra.mxu0 0.0
    %823 = vmatprep.subr.mxu0 0.0
    %824 = vmatpush1.xpose.msra.mxu0 0.0
    %825 = vmatprep.subr.mxu0 0.0
    %826 = vmatpush1.xpose.msra.mxu0 0.0
    %827 = vmatprep.subr.mxu0 0.0
    %828 = vmatpush1.xpose.msra.mxu0 0.0
    %829 = vmatprep.subr.mxu0 0.0
    %830 = vmatpush1.xpose.msra.mxu0 0.0
    %831 = vmatprep.subr.mxu0 0.0
    %832 = vmatpush1.xpose.msra.mxu0 0.0
    %833 = vmatprep.subr.mxu0 0.0
    %834 = vmatpush1.xpose.msra.mxu0 0.0
    %835 = vmatprep.subr.mxu0 0.0
    %836 = vmatpush1.xpose.msra.mxu0 0.0
    %837 = vmatprep.subr.mxu0 0.0
    %838 = vmatpush1.xpose.msra.mxu0 0.0
    %839 = vmatprep.subr.mxu0 0.0
    %840 = vmatpush1.xpose.msra.mxu0 0.0
    %841 = vmatprep.subr.mxu0 0.0
    %842 = vmatpush1.xpose.msra.mxu0 0.0
    %843 = vmatprep.subr.mxu0 0.0
    %844 = vmatpush1.xpose.msra.mxu0 0.0
    %845 = vmatprep.subr.mxu0 0.0
    %846 = vmatpush1.xpose.msra.mxu0 0.0
    %847 = vmatprep.subr.mxu0 0.0
    %848 = vmatpush1.xpose.msra.mxu0 0.0
    %849 = vmatprep.subr.mxu0 0.0
    %850 = vmatpush1.xpose.msra.mxu0 0.0
    %851 = vmatprep.subr.mxu0 0.0
    %852 = vmatpush1.xpose.msra.mxu0 0.0
    %853 = vmatprep.subr.mxu0 0.0
    %854 = vmatpush1.xpose.msra.mxu0 0.0
    %855 = vmatprep.subr.mxu0 0.0
    %856 = vmatpush1.xpose.msra.mxu0 0.0
    %857 = vmatprep.subr.mxu0 0.0
    %858 = vmatpush1.xpose.msra.mxu0 0.0
    %859 = vmatprep.subr.mxu0 0.0
    %860 = vmatpush1.xpose.msra.mxu0 0.0
    %861 = vmatprep.subr.mxu0 0.0
    %862 = vmatpush1.xpose.msra.mxu0 0.0
    %863 = vmatprep.subr.mxu0 0.0
    %864 = vmatpush1.xpose.msra.mxu0 0.0
    %865 = vmatprep.subr.mxu0 0.0
    %866 = vmatpush1.xpose.msra.mxu0 0.0
    %867 = vmatprep.subr.mxu0 0.0
    %868 = vmatpush1.xpose.msra.mxu0 0.0
    %869 = vmatprep.subr.mxu0 0.0
    %870 = vmatpush1.xpose.msra.mxu0 0.0
    %871 = vmatprep.subr.mxu0 0.0
    %872 = vmatpush1.xpose.msra.mxu0 0.0
    %873 = vmatprep.subr.mxu0 0.0
    %874 = vmatpush1.xpose.msra.mxu0 0.0
    %875 = vmatprep.mubr.f32.mxu0 0.0
    %876 = vmatmul.mubr.f32.gmra.mrb[0].mxu0 %v807
    %v877 = vpop.f32.mrb[0].mxu0
    %v878 = vadd.f32 0.0, %v877
    %v879 = vpop.f32.mrb[0].mxu0
    %880 = vdwg.mxu0
    %v881 = vsel %vm436, %v399, 0
    %v883 = vsel %vm436, %v413, 0
    %885 = vmatprep.subr.mxu0 0.0
    %886 = vmatpush1.xpose.msra.mxu0 %v883
    %887 = vmatprep.subr.mxu0 0.0
    %888 = vmatpush1.xpose.msra.mxu0 0.0
    %889 = vmatprep.subr.mxu0 0.0
    %890 = vmatpush1.xpose.msra.mxu0 0.0
    %891 = vmatprep.subr.mxu0 0.0
    %892 = vmatpush1.xpose.msra.mxu0 0.0
    %893 = vmatprep.subr.mxu0 0.0
    %894 = vmatpush1.xpose.msra.mxu0 0.0
    %895 = vmatprep.subr.mxu0 0.0
    %896 = vmatpush1.xpose.msra.mxu0 0.0
    %897 = vmatprep.subr.mxu0 0.0
    %898 = vmatpush1.xpose.msra.mxu0 0.0
    %899 = vmatprep.subr.mxu0 0.0
    %900 = vmatpush1.xpose.msra.mxu0 0.0
    %901 = vmatprep.subr.mxu0 0.0
    %902 = vmatpush1.xpose.msra.mxu0 0.0
    %903 = vmatprep.subr.mxu0 0.0
    %904 = vmatpush1.xpose.msra.mxu0 0.0
    %905 = vmatprep.subr.mxu0 0.0
    %906 = vmatpush1.xpose.msra.mxu0 0.0
    %907 = vmatprep.subr.mxu0 0.0
    %908 = vmatpush1.xpose.msra.mxu0 0.0
    %909 = vmatprep.subr.mxu0 0.0
    %910 = vmatpush1.xpose.msra.mxu0 0.0
    %911 = vmatprep.subr.mxu0 0.0
    %912 = vmatpush1.xpose.msra.mxu0 0.0
    %913 = vmatprep.subr.mxu0 0.0
    %914 = vmatpush1.xpose.msra.mxu0 0.0
    %915 = vmatprep.subr.mxu0 0.0
    %916 = vmatpush1.xpose.msra.mxu0 0.0
    %917 = vmatprep.subr.mxu0 0.0
    %918 = vmatpush1.xpose.msra.mxu0 0.0
    %919 = vmatprep.subr.mxu0 0.0
    %920 = vmatpush1.xpose.msra.mxu0 0.0
    %921 = vmatprep.subr.mxu0 0.0
    %922 = vmatpush1.xpose.msra.mxu0 0.0
    %923 = vmatprep.subr.mxu0 0.0
    %924 = vmatpush1.xpose.msra.mxu0 0.0
    %925 = vmatprep.subr.mxu0 0.0
    %926 = vmatpush1.xpose.msra.mxu0 0.0
    %927 = vmatprep.subr.mxu0 0.0
    %928 = vmatpush1.xpose.msra.mxu0 0.0
    %929 = vmatprep.subr.mxu0 0.0
    %930 = vmatpush1.xpose.msra.mxu0 0.0
    %931 = vmatprep.subr.mxu0 0.0
    %932 = vmatpush1.xpose.msra.mxu0 0.0
    %933 = vmatprep.subr.mxu0 0.0
    %934 = vmatpush1.xpose.msra.mxu0 0.0
    %935 = vmatprep.subr.mxu0 0.0
    %936 = vmatpush1.xpose.msra.mxu0 0.0
    %937 = vmatprep.subr.mxu0 0.0
    %938 = vmatpush1.xpose.msra.mxu0 0.0
    %939 = vmatprep.subr.mxu0 0.0
    %940 = vmatpush1.xpose.msra.mxu0 0.0
    %941 = vmatprep.subr.mxu0 0.0
    %942 = vmatpush1.xpose.msra.mxu0 0.0
    %943 = vmatprep.subr.mxu0 0.0
    %944 = vmatpush1.xpose.msra.mxu0 0.0
    %945 = vmatprep.subr.mxu0 0.0
    %946 = vmatpush1.xpose.msra.mxu0 0.0
    %947 = vmatprep.subr.mxu0 0.0
    %948 = vmatpush1.xpose.msra.mxu0 0.0
    %949 = vmatprep.mubr.f32.mxu0 0.0
    %950 = vmatmul.mubr.f32.gmra.mrb[0].mxu0 %v881
    %v951 = vpop.f32.mrb[0].mxu0
    %v952 = vadd.f32 0.0, %v951
    %v953 = vpop.f32.mrb[0].mxu0
    %954 = vdwg.mxu0
    %v955 = vsel %vm436, %v401, 0
    %v957 = vsel %vm436, %v415, 0
    %959 = vmatprep.subr.mxu0 0.0
    %960 = vmatpush1.xpose.msra.mxu0 %v957
    %961 = vmatprep.subr.mxu0 0.0
    %962 = vmatpush1.xpose.msra.mxu0 0.0
    %963 = vmatprep.subr.mxu0 0.0
    %964 = vmatpush1.xpose.msra.mxu0 0.0
    %965 = vmatprep.subr.mxu0 0.0
    %966 = vmatpush1.xpose.msra.mxu0 0.0
    %967 = vmatprep.subr.mxu0 0.0
    %968 = vmatpush1.xpose.msra.mxu0 0.0
    %969 = vmatprep.subr.mxu0 0.0
    %970 = vmatpush1.xpose.msra.mxu0 0.0
    %971 = vmatprep.subr.mxu0 0.0
    %972 = vmatpush1.xpose.msra.mxu0 0.0
    %973 = vmatprep.subr.mxu0 0.0
    %974 = vmatpush1.xpose.msra.mxu0 0.0
    %975 = vmatprep.subr.mxu0 0.0
    %976 = vmatpush1.xpose.msra.mxu0 0.0
    %977 = vmatprep.subr.mxu0 0.0
    %978 = vmatpush1.xpose.msra.mxu0 0.0
    %979 = vmatprep.subr.mxu0 0.0
    %980 = vmatpush1.xpose.msra.mxu0 0.0
    %981 = vmatprep.subr.mxu0 0.0
    %982 = vmatpush1.xpose.msra.mxu0 0.0
    %983 = vmatprep.subr.mxu0 0.0
    %984 = vmatpush1.xpose.msra.mxu0 0.0
    %985 = vmatprep.subr.mxu0 0.0
    %986 = vmatpush1.xpose.msra.mxu0 0.0
    %987 = vmatprep.subr.mxu0 0.0
    %988 = vmatpush1.xpose.msra.mxu0 0.0
    %989 = vmatprep.subr.mxu0 0.0
    %990 = vmatpush1.xpose.msra.mxu0 0.0
    %991 = vmatprep.subr.mxu0 0.0
    %992 = vmatpush1.xpose.msra.mxu0 0.0
    %993 = vmatprep.subr.mxu0 0.0
    %994 = vmatpush1.xpose.msra.mxu0 0.0
    %995 = vmatprep.subr.mxu0 0.0
    %996 = vmatpush1.xpose.msra.mxu0 0.0
    %997 = vmatprep.subr.mxu0 0.0
    %998 = vmatpush1.xpose.msra.mxu0 0.0
    %999 = vmatprep.subr.mxu0 0.0
    %1000 = vmatpush1.xpose.msra.mxu0 0.0
    %1001 = vmatprep.subr.mxu0 0.0
    %1002 = vmatpush1.xpose.msra.mxu0 0.0
    %1003 = vmatprep.subr.mxu0 0.0
    %1004 = vmatpush1.xpose.msra.mxu0 0.0
    %1005 = vmatprep.subr.mxu0 0.0
    %1006 = vmatpush1.xpose.msra.mxu0 0.0
    %1007 = vmatprep.subr.mxu0 0.0
    %1008 = vmatpush1.xpose.msra.mxu0 0.0
    %1009 = vmatprep.subr.mxu0 0.0
    %1010 = vmatpush1.xpose.msra.mxu0 0.0
    %1011 = vmatprep.subr.mxu0 0.0
    %1012 = vmatpush1.xpose.msra.mxu0 0.0
    %1013 = vmatprep.subr.mxu0 0.0
    %1014 = vmatpush1.xpose.msra.mxu0 0.0
    %1015 = vmatprep.subr.mxu0 0.0
    %1016 = vmatpush1.xpose.msra.mxu0 0.0
    %1017 = vmatprep.subr.mxu0 0.0
    %1018 = vmatpush1.xpose.msra.mxu0 0.0
    %1019 = vmatprep.subr.mxu0 0.0
    %1020 = vmatpush1.xpose.msra.mxu0 0.0
    %1021 = vmatprep.subr.mxu0 0.0
    %1022 = vmatpush1.xpose.msra.mxu0 0.0
    %1023 = vmatprep.mubr.f32.mxu0 0.0
    %1024 = vmatmul.mubr.f32.gmra.mrb[0].mxu0 %v955
    %v1025 = vpop.f32.mrb[0].mxu0
    %v1026 = vadd.f32 0.0, %v1025
    %v1027 = vpop.f32.mrb[0].mxu0
    %1028 = vdwg.mxu0
    %v1029 = vsel %vm436, %v508, -inf
    %1030 = vmax.xlane.f32.xlu0 %v1029
    %v1031 = vpop.xlane.xlu0 %1030
    %v1032 = vsel %vm436, %v582, -inf
    %1033 = vmax.xlane.f32.xlu0 %v1032
    %v1034 = vpop.xlane.xlu0 %1033
    %v1035 = vsel %vm436, %v656, -inf
    %1036 = vmax.xlane.f32.xlu0 %v1035
    %v1037 = vpop.xlane.xlu0 %1036
    %v1038 = vsel %vm436, %v730, -inf
    %1039 = vmax.xlane.f32.xlu0 %v1038
    %v1040 = vpop.xlane.xlu0 %1039
    %v1041 = vsel %vm436, %v804, -inf
    %1042 = vmax.xlane.f32.xlu0 %v1041
    %v1043 = vpop.xlane.xlu0 %1042
    %v1044 = vsel %vm436, %v878, -inf
    %1045 = vmax.xlane.f32.xlu0 %v1044
    %v1046 = vpop.xlane.xlu0 %1045
    %v1047 = vsel %vm436, %v952, -inf
    %1048 = vmax.xlane.f32.xlu0 %v1047
    %v1049 = vpop.xlane.xlu0 %1048
    %v1050 = vsel %vm436, %v1026, -inf
    %1051 = vmax.xlane.f32.xlu0 %v1050
    %v1052 = vpop.xlane.xlu0 %1051
    %v1053 = vsub.f32 %v508, %v1031
    %v1054 = vsub.f32 %v582, %v1034
    %v1055 = vsub.f32 %v656, %v1037
    %v1056 = vsub.f32 %v730, %v1040
    %v1057 = vsub.f32 %v804, %v1043
    %v1058 = vsub.f32 %v878, %v1046
    %v1059 = vsub.f32 %v952, %v1049
    %v1060 = vsub.f32 %v1026, %v1052
    %v1061 = vmul.f32 %v1053, 1.442695
    %v1062 = vpow.pop %v1061
    %v1063 = vmul.f32 %v1054, 1.442695
    %v1064 = vpow.pop %v1063
    %v1065 = vmul.f32 %v1055, 1.442695
    %v1066 = vpow.pop %v1065
    %v1067 = vmul.f32 %v1056, 1.442695
    %v1068 = vpow.pop %v1067
    %v1069 = vmul.f32 %v1057, 1.442695
    %v1070 = vpow.pop %v1069
    %v1071 = vmul.f32 %v1058, 1.442695
    %v1072 = vpow.pop %v1071
    %v1073 = vmul.f32 %v1059, 1.442695
    %v1074 = vpow.pop %v1073
    %v1075 = vmul.f32 %v1060, 1.442695
    %v1076 = vpow.pop %v1075
    %v1077 = vsel %vm436, %v1062, 0.0
    %1078 = vadd.xlane.f32.xlu0 %v1077
    %v1079 = vpop.xlane.xlu0 %1078
    %v1080 = vsel %vm436, %v1064, 0.0
    %1081 = vadd.xlane.f32.xlu0 %v1080
    %v1082 = vpop.xlane.xlu0 %1081
    %v1083 = vsel %vm436, %v1066, 0.0
    %1084 = vadd.xlane.f32.xlu0 %v1083
    %v1085 = vpop.xlane.xlu0 %1084
    %v1086 = vsel %vm436, %v1068, 0.0
    %1087 = vadd.xlane.f32.xlu0 %v1086
    %v1088 = vpop.xlane.xlu0 %1087
    %v1089 = vsel %vm436, %v1070, 0.0
    %1090 = vadd.xlane.f32.xlu0 %v1089
    %v1091 = vpop.xlane.xlu0 %1090
    %v1092 = vsel %vm436, %v1072, 0.0
    %1093 = vadd.xlane.f32.xlu0 %v1092
    %v1094 = vpop.xlane.xlu0 %1093
    %v1095 = vsel %vm436, %v1074, 0.0
    %1096 = vadd.xlane.f32.xlu0 %v1095
    %v1097 = vpop.xlane.xlu0 %1096
    %v1098 = vsel %vm436, %v1076, 0.0
    %1099 = vadd.xlane.f32.xlu0 %v1098
    %v1100 = vpop.xlane.xlu0 %1099
    %v1101 = vrcp.pop %v1079
    %v1102 = vrcp.pop %v1082
    %v1103 = vrcp.pop %v1085
    %v1104 = vrcp.pop %v1088
    %v1105 = vrcp.pop %v1091
    %v1106 = vrcp.pop %v1094
    %v1107 = vrcp.pop %v1097
    %v1108 = vrcp.pop %v1100
    %v1109 = vmul.f32 %v1062, %v1101
    %v1110 = vmul.f32 %v1064, %v1102
    %v1111 = vmul.f32 %v1066, %v1103
    %v1112 = vmul.f32 %v1068, %v1104
    %v1113 = vmul.f32 %v1070, %v1105
    %v1114 = vmul.f32 %v1072, %v1106
    %v1115 = vmul.f32 %v1074, %v1107
    %v1116 = vmul.f32 %v1076, %v1108
    %1117 = vst.msk [vmem:[#allocation14] sm:$0xff] %vm436, %v1109
    %1118 = vst.msk [vmem:[#allocation14 + $0x8] sm:$0xff] %vm436, %v1110
    %1119 = vst.msk [vmem:[#allocation14 + $0x10] sm:$0xff] %vm436, %v1111
    %1120 = vst.msk [vmem:[#allocation14 + $0x18] sm:$0xff] %vm436, %v1112
    %1121 = vst.msk [vmem:[#allocation14 + $0x20] sm:$0xff] %vm436, %v1113
    %1122 = vst.msk [vmem:[#allocation14 + $0x28] sm:$0xff] %vm436, %v1114
    %1123 = vst.msk [vmem:[#allocation14 + $0x30] sm:$0xff] %vm436, %v1115
    %1124 = vst.msk [vmem:[#allocation14 + $0x38] sm:$0xff] %vm436, %v1116
    %v1126 = vsel %vm436, %v1109, 0
    %1128 = vmatprep.subr.mxu0 0.0
    %1129 = vmatpush1.msra.mxu0 %v380
    %1130 = vmatprep.subr.mxu0 0.0
    %1131 = vmatpush1.msra.mxu0 0.0
    %1132 = vmatprep.subr.mxu0 0.0
    %1133 = vmatpush1.msra.mxu0 0.0
    %1134 = vmatprep.subr.mxu0 0.0
    %1135 = vmatpush1.msra.mxu0 0.0
    %1136 = vmatprep.subr.mxu0 0.0
    %1137 = vmatpush1.msra.mxu0 0.0
    %1138 = vmatprep.subr.mxu0 0.0
    %1139 = vmatpush1.msra.mxu0 0.0
    %1140 = vmatprep.subr.mxu0 0.0
    %1141 = vmatpush1.msra.mxu0 0.0
    %1142 = vmatprep.subr.mxu0 0.0
    %1143 = vmatpush1.msra.mxu0 0.0
    %1144 = vmatprep.subr.mxu0 0.0
    %1145 = vmatpush1.msra.mxu0 0.0
    %1146 = vmatprep.subr.mxu0 0.0
    %1147 = vmatpush1.msra.mxu0 0.0
    %1148 = vmatprep.subr.mxu0 0.0
    %1149 = vmatpush1.msra.mxu0 0.0
    %1150 = vmatprep.subr.mxu0 0.0
    %1151 = vmatpush1.msra.mxu0 0.0
    %1152 = vmatprep.subr.mxu0 0.0
    %1153 = vmatpush1.msra.mxu0 0.0
    %1154 = vmatprep.subr.mxu0 0.0
    %1155 = vmatpush1.msra.mxu0 0.0
    %1156 = vmatprep.subr.mxu0 0.0
    %1157 = vmatpush1.msra.mxu0 0.0
    %1158 = vmatprep.subr.mxu0 0.0
    %1159 = vmatpush1.msra.mxu0 0.0
    %1160 = vmatprep.subr.mxu0 0.0
    %1161 = vmatpush1.msra.mxu0 0.0
    %1162 = vmatprep.subr.mxu0 0.0
    %1163 = vmatpush1.msra.mxu0 0.0
    %1164 = vmatprep.subr.mxu0 0.0
    %1165 = vmatpush1.msra.mxu0 0.0
    %1166 = vmatprep.subr.mxu0 0.0
    %1167 = vmatpush1.msra.mxu0 0.0
    %1168 = vmatprep.subr.mxu0 0.0
    %1169 = vmatpush1.msra.mxu0 0.0
    %1170 = vmatprep.subr.mxu0 0.0
    %1171 = vmatpush1.msra.mxu0 0.0
    %1172 = vmatprep.subr.mxu0 0.0
    %1173 = vmatpush1.msra.mxu0 0.0
    %1174 = vmatprep.subr.mxu0 0.0
    %1175 = vmatpush1.msra.mxu0 0.0
    %1176 = vmatprep.subr.mxu0 0.0
    %1177 = vmatpush1.msra.mxu0 0.0
    %1178 = vmatprep.subr.mxu0 0.0
    %1179 = vmatpush1.msra.mxu0 0.0
    %1180 = vmatprep.subr.mxu0 0.0
    %1181 = vmatpush1.msra.mxu0 0.0
    %1182 = vmatprep.subr.mxu0 0.0
    %1183 = vmatpush1.msra.mxu0 0.0
    %1184 = vmatprep.subr.mxu0 0.0
    %1185 = vmatpush1.msra.mxu0 0.0
    %1186 = vmatprep.subr.mxu0 0.0
    %1187 = vmatpush1.msra.mxu0 0.0
    %1188 = vmatprep.subr.mxu0 0.0
    %1189 = vmatpush1.msra.mxu0 0.0
    %1190 = vmatprep.subr.mxu0 0.0
    %1191 = vmatpush1.msra.mxu0 0.0
    %1192 = vmatprep.mubr.f32.mxu0 0.0
    %1193 = vmatmul.mubr.f32.gmra.mrb[0].mxu0 %v1126
    %v1194 = vpop.f32.mrb[0].mxu0
    %v1195 = vadd.f32 0.0, %v1194
    %v1196 = vpop.f32.mrb[0].mxu0
    %1197 = vdwg.mxu0
    %v1199 = vsel %vm436, %v1110, 0
    %1201 = vmatprep.subr.mxu0 0.0
    %1202 = vmatpush1.msra.mxu0 %v385
    %1203 = vmatprep.subr.mxu0 0.0
    %1204 = vmatpush1.msra.mxu0 0.0
    %1205 = vmatprep.subr.mxu0 0.0
    %1206 = vmatpush1.msra.mxu0 0.0
    %1207 = vmatprep.subr.mxu0 0.0
    %1208 = vmatpush1.msra.mxu0 0.0
    %1209 = vmatprep.subr.mxu0 0.0
    %1210 = vmatpush1.msra.mxu0 0.0
    %1211 = vmatprep.subr.mxu0 0.0
    %1212 = vmatpush1.msra.mxu0 0.0
    %1213 = vmatprep.subr.mxu0 0.0
    %1214 = vmatpush1.msra.mxu0 0.0
    %1215 = vmatprep.subr.mxu0 0.0
    %1216 = vmatpush1.msra.mxu0 0.0
    %1217 = vmatprep.subr.mxu0 0.0
    %1218 = vmatpush1.msra.mxu0 0.0
    %1219 = vmatprep.subr.mxu0 0.0
    %1220 = vmatpush1.msra.mxu0 0.0
    %1221 = vmatprep.subr.mxu0 0.0
    %1222 = vmatpush1.msra.mxu0 0.0
    %1223 = vmatprep.subr.mxu0 0.0
    %1224 = vmatpush1.msra.mxu0 0.0
    %1225 = vmatprep.subr.mxu0 0.0
    %1226 = vmatpush1.msra.mxu0 0.0
    %1227 = vmatprep.subr.mxu0 0.0
    %1228 = vmatpush1.msra.mxu0 0.0
    %1229 = vmatprep.subr.mxu0 0.0
    %1230 = vmatpush1.msra.mxu0 0.0
    %1231 = vmatprep.subr.mxu0 0.0
    %1232 = vmatpush1.msra.mxu0 0.0
    %1233 = vmatprep.subr.mxu0 0.0
    %1234 = vmatpush1.msra.mxu0 0.0
    %1235 = vmatprep.subr.mxu0 0.0
    %1236 = vmatpush1.msra.mxu0 0.0
    %1237 = vmatprep.subr.mxu0 0.0
    %1238 = vmatpush1.msra.mxu0 0.0
    %1239 = vmatprep.subr.mxu0 0.0
    %1240 = vmatpush1.msra.mxu0 0.0
    %1241 = vmatprep.subr.mxu0 0.0
    %1242 = vmatpush1.msra.mxu0 0.0
    %1243 = vmatprep.subr.mxu0 0.0
    %1244 = vmatpush1.msra.mxu0 0.0
    %1245 = vmatprep.subr.mxu0 0.0
    %1246 = vmatpush1.msra.mxu0 0.0
    %1247 = vmatprep.subr.mxu0 0.0
    %1248 = vmatpush1.msra.mxu0 0.0
    %1249 = vmatprep.subr.mxu0 0.0
    %1250 = vmatpush1.msra.mxu0 0.0
    %1251 = vmatprep.subr.mxu0 0.0
    %1252 = vmatpush1.msra.mxu0 0.0
    %1253 = vmatprep.subr.mxu0 0.0
    %1254 = vmatpush1.msra.mxu0 0.0
    %1255 = vmatprep.subr.mxu0 0.0
    %1256 = vmatpush1.msra.mxu0 0.0
    %1257 = vmatprep.subr.mxu0 0.0
    %1258 = vmatpush1.msra.mxu0 0.0
    %1259 = vmatprep.subr.mxu0 0.0
    %1260 = vmatpush1.msra.mxu0 0.0
    %1261 = vmatprep.subr.mxu0 0.0
    %1262 = vmatpush1.msra.mxu0 0.0
    %1263 = vmatprep.subr.mxu0 0.0
    %1264 = vmatpush1.msra.mxu0 0.0
    %1265 = vmatprep.mubr.f32.mxu0 0.0
    %1266 = vmatmul.mubr.f32.gmra.mrb[0].mxu0 %v1199
    %v1267 = vpop.f32.mrb[0].mxu0
    %v1268 = vadd.f32 0.0, %v1267
    %v1269 = vpop.f32.mrb[0].mxu0
    %1270 = vdwg.mxu0
    %v1272 = vsel %vm436, %v1111, 0
    %1274 = vmatprep.subr.mxu0 0.0
    %1275 = vmatpush1.msra.mxu0 %v419
    %1276 = vmatprep.subr.mxu0 0.0
    %1277 = vmatpush1.msra.mxu0 0.0
    %1278 = vmatprep.subr.mxu0 0.0
    %1279 = vmatpush1.msra.mxu0 0.0
    %1280 = vmatprep.subr.mxu0 0.0
    %1281 = vmatpush1.msra.mxu0 0.0
    %1282 = vmatprep.subr.mxu0 0.0
    %1283 = vmatpush1.msra.mxu0 0.0
    %1284 = vmatprep.subr.mxu0 0.0
    %1285 = vmatpush1.msra.mxu0 0.0
    %1286 = vmatprep.subr.mxu0 0.0
    %1287 = vmatpush1.msra.mxu0 0.0
    %1288 = vmatprep.subr.mxu0 0.0
    %1289 = vmatpush1.msra.mxu0 0.0
    %1290 = vmatprep.subr.mxu0 0.0
    %1291 = vmatpush1.msra.mxu0 0.0
    %1292 = vmatprep.subr.mxu0 0.0
    %1293 = vmatpush1.msra.mxu0 0.0
    %1294 = vmatprep.subr.mxu0 0.0
    %1295 = vmatpush1.msra.mxu0 0.0
    %1296 = vmatprep.subr.mxu0 0.0
    %1297 = vmatpush1.msra.mxu0 0.0
    %1298 = vmatprep.subr.mxu0 0.0
    %1299 = vmatpush1.msra.mxu0 0.0
    %1300 = vmatprep.subr.mxu0 0.0
    %1301 = vmatpush1.msra.mxu0 0.0
    %1302 = vmatprep.subr.mxu0 0.0
    %1303 = vmatpush1.msra.mxu0 0.0
    %1304 = vmatprep.subr.mxu0 0.0
    %1305 = vmatpush1.msra.mxu0 0.0
    %1306 = vmatprep.subr.mxu0 0.0
    %1307 = vmatpush1.msra.mxu0 0.0
    %1308 = vmatprep.subr.mxu0 0.0
    %1309 = vmatpush1.msra.mxu0 0.0
    %1310 = vmatprep.subr.mxu0 0.0
    %1311 = vmatpush1.msra.mxu0 0.0
    %1312 = vmatprep.subr.mxu0 0.0
    %1313 = vmatpush1.msra.mxu0 0.0
    %1314 = vmatprep.subr.mxu0 0.0
    %1315 = vmatpush1.msra.mxu0 0.0
    %1316 = vmatprep.subr.mxu0 0.0
    %1317 = vmatpush1.msra.mxu0 0.0
    %1318 = vmatprep.subr.mxu0 0.0
    %1319 = vmatpush1.msra.mxu0 0.0
    %1320 = vmatprep.subr.mxu0 0.0
    %1321 = vmatpush1.msra.mxu0 0.0
    %1322 = vmatprep.subr.mxu0 0.0
    %1323 = vmatpush1.msra.mxu0 0.0
    %1324 = vmatprep.subr.mxu0 0.0
    %1325 = vmatpush1.msra.mxu0 0.0
    %1326 = vmatprep.subr.mxu0 0.0
    %1327 = vmatpush1.msra.mxu0 0.0
    %1328 = vmatprep.subr.mxu0 0.0
    %1329 = vmatpush1.msra.mxu0 0.0
    %1330 = vmatprep.subr.mxu0 0.0
    %1331 = vmatpush1.msra.mxu0 0.0
    %1332 = vmatprep.subr.mxu0 0.0
    %1333 = vmatpush1.msra.mxu0 0.0
    %1334 = vmatprep.subr.mxu0 0.0
    %1335 = vmatpush1.msra.mxu0 0.0
    %1336 = vmatprep.subr.mxu0 0.0
    %1337 = vmatpush1.msra.mxu0 0.0
    %1338 = vmatprep.mubr.f32.mxu0 0.0
    %1339 = vmatmul.mubr.f32.gmra.mrb[0].mxu0 %v1272
    %v1340 = vpop.f32.mrb[0].mxu0
    %v1341 = vadd.f32 0.0, %v1340
    %v1342 = vpop.f32.mrb[0].mxu0
    %1343 = vdwg.mxu0
    %v1345 = vsel %vm436, %v1112, 0
    %1347 = vmatprep.subr.mxu0 0.0
    %1348 = vmatpush1.msra.mxu0 %v421
    %1349 = vmatprep.subr.mxu0 0.0
    %1350 = vmatpush1.msra.mxu0 0.0
    %1351 = vmatprep.subr.mxu0 0.0
    %1352 = vmatpush1.msra.mxu0 0.0
    %1353 = vmatprep.subr.mxu0 0.0
    %1354 = vmatpush1.msra.mxu0 0.0
    %1355 = vmatprep.subr.mxu0 0.0
    %1356 = vmatpush1.msra.mxu0 0.0
    %1357 = vmatprep.subr.mxu0 0.0
    %1358 = vmatpush1.msra.mxu0 0.0
    %1359 = vmatprep.subr.mxu0 0.0
    %1360 = vmatpush1.msra.mxu0 0.0
    %1361 = vmatprep.subr.mxu0 0.0
    %1362 = vmatpush1.msra.mxu0 0.0
    %1363 = vmatprep.subr.mxu0 0.0
    %1364 = vmatpush1.msra.mxu0 0.0
    %1365 = vmatprep.subr.mxu0 0.0
    %1366 = vmatpush1.msra.mxu0 0.0
    %1367 = vmatprep.subr.mxu0 0.0
    %1368 = vmatpush1.msra.mxu0 0.0
    %1369 = vmatprep.subr.mxu0 0.0
    %1370 = vmatpush1.msra.mxu0 0.0
    %1371 = vmatprep.subr.mxu0 0.0
    %1372 = vmatpush1.msra.mxu0 0.0
    %1373 = vmatprep.subr.mxu0 0.0
    %1374 = vmatpush1.msra.mxu0 0.0
    %1375 = vmatprep.subr.mxu0 0.0
    %1376 = vmatpush1.msra.mxu0 0.0
    %1377 = vmatprep.subr.mxu0 0.0
    %1378 = vmatpush1.msra.mxu0 0.0
    %1379 = vmatprep.subr.mxu0 0.0
    %1380 = vmatpush1.msra.mxu0 0.0
    %1381 = vmatprep.subr.mxu0 0.0
    %1382 = vmatpush1.msra.mxu0 0.0
    %1383 = vmatprep.subr.mxu0 0.0
    %1384 = vmatpush1.msra.mxu0 0.0
    %1385 = vmatprep.subr.mxu0 0.0
    %1386 = vmatpush1.msra.mxu0 0.0
    %1387 = vmatprep.subr.mxu0 0.0
    %1388 = vmatpush1.msra.mxu0 0.0
    %1389 = vmatprep.subr.mxu0 0.0
    %1390 = vmatpush1.msra.mxu0 0.0
    %1391 = vmatprep.subr.mxu0 0.0
    %1392 = vmatpush1.msra.mxu0 0.0
    %1393 = vmatprep.subr.mxu0 0.0
    %1394 = vmatpush1.msra.mxu0 0.0
    %1395 = vmatprep.subr.mxu0 0.0
    %1396 = vmatpush1.msra.mxu0 0.0
    %1397 = vmatprep.subr.mxu0 0.0
    %1398 = vmatpush1.msra.mxu0 0.0
    %1399 = vmatprep.subr.mxu0 0.0
    %1400 = vmatpush1.msra.mxu0 0.0
    %1401 = vmatprep.subr.mxu0 0.0
    %1402 = vmatpush1.msra.mxu0 0.0
    %1403 = vmatprep.subr.mxu0 0.0
    %1404 = vmatpush1.msra.mxu0 0.0
    %1405 = vmatprep.subr.mxu0 0.0
    %1406 = vmatpush1.msra.mxu0 0.0
    %1407 = vmatprep.subr.mxu0 0.0
    %1408 = vmatpush1.msra.mxu0 0.0
    %1409 = vmatprep.subr.mxu0 0.0
    %1410 = vmatpush1.msra.mxu0 0.0
    %1411 = vmatprep.mubr.f32.mxu0 0.0
    %1412 = vmatmul.mubr.f32.gmra.mrb[0].mxu0 %v1345
    %v1413 = vpop.f32.mrb[0].mxu0
    %v1414 = vadd.f32 0.0, %v1413
    %v1415 = vpop.f32.mrb[0].mxu0
    %1416 = vdwg.mxu0
    %v1418 = vsel %vm436, %v1113, 0
    %1420 = vmatprep.subr.mxu0 0.0
    %1421 = vmatpush1.msra.mxu0 %v425
    %1422 = vmatprep.subr.mxu0 0.0
    %1423 = vmatpush1.msra.mxu0 0.0
    %1424 = vmatprep.subr.mxu0 0.0
    %1425 = vmatpush1.msra.mxu0 0.0
    %1426 = vmatprep.subr.mxu0 0.0
    %1427 = vmatpush1.msra.mxu0 0.0
    %1428 = vmatprep.subr.mxu0 0.0
    %1429 = vmatpush1.msra.mxu0 0.0
    %1430 = vmatprep.subr.mxu0 0.0
    %1431 = vmatpush1.msra.mxu0 0.0
    %1432 = vmatprep.subr.mxu0 0.0
    %1433 = vmatpush1.msra.mxu0 0.0
    %1434 = vmatprep.subr.mxu0 0.0
    %1435 = vmatpush1.msra.mxu0 0.0
    %1436 = vmatprep.subr.mxu0 0.0
    %1437 = vmatpush1.msra.mxu0 0.0
    %1438 = vmatprep.subr.mxu0 0.0
    %1439 = vmatpush1.msra.mxu0 0.0
    %1440 = vmatprep.subr.mxu0 0.0
    %1441 = vmatpush1.msra.mxu0 0.0
    %1442 = vmatprep.subr.mxu0 0.0
    %1443 = vmatpush1.msra.mxu0 0.0
    %1444 = vmatprep.subr.mxu0 0.0
    %1445 = vmatpush1.msra.mxu0 0.0
    %1446 = vmatprep.subr.mxu0 0.0
    %1447 = vmatpush1.msra.mxu0 0.0
    %1448 = vmatprep.subr.mxu0 0.0
    %1449 = vmatpush1.msra.mxu0 0.0
    %1450 = vmatprep.subr.mxu0 0.0
    %1451 = vmatpush1.msra.mxu0 0.0
    %1452 = vmatprep.subr.mxu0 0.0
    %1453 = vmatpush1.msra.mxu0 0.0
    %1454 = vmatprep.subr.mxu0 0.0
    %1455 = vmatpush1.msra.mxu0 0.0
    %1456 = vmatprep.subr.mxu0 0.0
    %1457 = vmatpush1.msra.mxu0 0.0
    %1458 = vmatprep.subr.mxu0 0.0
    %1459 = vmatpush1.msra.mxu0 0.0
    %1460 = vmatprep.subr.mxu0 0.0
    %1461 = vmatpush1.msra.mxu0 0.0
    %1462 = vmatprep.subr.mxu0 0.0
    %1463 = vmatpush1.msra.mxu0 0.0
    %1464 = vmatprep.subr.mxu0 0.0
    %1465 = vmatpush1.msra.mxu0 0.0
    %1466 = vmatprep.subr.mxu0 0.0
    %1467 = vmatpush1.msra.mxu0 0.0
    %1468 = vmatprep.subr.mxu0 0.0
    %1469 = vmatpush1.msra.mxu0 0.0
    %1470 = vmatprep.subr.mxu0 0.0
    %1471 = vmatpush1.msra.mxu0 0.0
    %1472 = vmatprep.subr.mxu0 0.0
    %1473 = vmatpush1.msra.mxu0 0.0
    %1474 = vmatprep.subr.mxu0 0.0
    %1475 = vmatpush1.msra.mxu0 0.0
    %1476 = vmatprep.subr.mxu0 0.0
    %1477 = vmatpush1.msra.mxu0 0.0
    %1478 = vmatprep.subr.mxu0 0.0
    %1479 = vmatpush1.msra.mxu0 0.0
    %1480 = vmatprep.subr.mxu0 0.0
    %1481 = vmatpush1.msra.mxu0 0.0
    %1482 = vmatprep.subr.mxu0 0.0
    %1483 = vmatpush1.msra.mxu0 0.0
    %1484 = vmatprep.mubr.f32.mxu0 0.0
    %1485 = vmatmul.mubr.f32.gmra.mrb[0].mxu0 %v1418
    %v1486 = vpop.f32.mrb[0].mxu0
    %v1487 = vadd.f32 0.0, %v1486
    %v1488 = vpop.f32.mrb[0].mxu0
    %1489 = vdwg.mxu0
    %v1491 = vsel %vm436, %v1114, 0
    %1493 = vmatprep.subr.mxu0 0.0
    %1494 = vmatpush1.msra.mxu0 %v427
    %1495 = vmatprep.subr.mxu0 0.0
    %1496 = vmatpush1.msra.mxu0 0.0
    %1497 = vmatprep.subr.mxu0 0.0
    %1498 = vmatpush1.msra.mxu0 0.0
    %1499 = vmatprep.subr.mxu0 0.0
    %1500 = vmatpush1.msra.mxu0 0.0
    %1501 = vmatprep.subr.mxu0 0.0
    %1502 = vmatpush1.msra.mxu0 0.0
    %1503 = vmatprep.subr.mxu0 0.0
    %1504 = vmatpush1.msra.mxu0 0.0
    %1505 = vmatprep.subr.mxu0 0.0
    %1506 = vmatpush1.msra.mxu0 0.0
    %1507 = vmatprep.subr.mxu0 0.0
    %1508 = vmatpush1.msra.mxu0 0.0
    %1509 = vmatprep.subr.mxu0 0.0
    %1510 = vmatpush1.msra.mxu0 0.0
    %1511 = vmatprep.subr.mxu0 0.0
    %1512 = vmatpush1.msra.mxu0 0.0
    %1513 = vmatprep.subr.mxu0 0.0
    %1514 = vmatpush1.msra.mxu0 0.0
    %1515 = vmatprep.subr.mxu0 0.0
    %1516 = vmatpush1.msra.mxu0 0.0
    %1517 = vmatprep.subr.mxu0 0.0
    %1518 = vmatpush1.msra.mxu0 0.0
    %1519 = vmatprep.subr.mxu0 0.0
    %1520 = vmatpush1.msra.mxu0 0.0
    %1521 = vmatprep.subr.mxu0 0.0
    %1522 = vmatpush1.msra.mxu0 0.0
    %1523 = vmatprep.subr.mxu0 0.0
    %1524 = vmatpush1.msra.mxu0 0.0
    %1525 = vmatprep.subr.mxu0 0.0
    %1526 = vmatpush1.msra.mxu0 0.0
    %1527 = vmatprep.subr.mxu0 0.0
    %1528 = vmatpush1.msra.mxu0 0.0
    %1529 = vmatprep.subr.mxu0 0.0
    %1530 = vmatpush1.msra.mxu0 0.0
    %1531 = vmatprep.subr.mxu0 0.0
    %1532 = vmatpush1.msra.mxu0 0.0
    %1533 = vmatprep.subr.mxu0 0.0
    %1534 = vmatpush1.msra.mxu0 0.0
    %1535 = vmatprep.subr.mxu0 0.0
    %1536 = vmatpush1.msra.mxu0 0.0
    %1537 = vmatprep.subr.mxu0 0.0
    %1538 = vmatpush1.msra.mxu0 0.0
    %1539 = vmatprep.subr.mxu0 0.0
    %1540 = vmatpush1.msra.mxu0 0.0
    %1541 = vmatprep.subr.mxu0 0.0
    %1542 = vmatpush1.msra.mxu0 0.0
    %1543 = vmatprep.subr.mxu0 0.0
    %1544 = vmatpush1.msra.mxu0 0.0
    %1545 = vmatprep.subr.mxu0 0.0
    %1546 = vmatpush1.msra.mxu0 0.0
    %1547 = vmatprep.subr.mxu0 0.0
    %1548 = vmatpush1.msra.mxu0 0.0
    %1549 = vmatprep.subr.mxu0 0.0
    %1550 = vmatpush1.msra.mxu0 0.0
    %1551 = vmatprep.subr.mxu0 0.0
    %1552 = vmatpush1.msra.mxu0 0.0
    %1553 = vmatprep.subr.mxu0 0.0
    %1554 = vmatpush1.msra.mxu0 0.0
    %1555 = vmatprep.subr.mxu0 0.0
    %1556 = vmatpush1.msra.mxu0 0.0
    %1557 = vmatprep.mubr.f32.mxu0 0.0
    %1558 = vmatmul.mubr.f32.gmra.mrb[0].mxu0 %v1491
    %v1559 = vpop.f32.mrb[0].mxu0
    %v1560 = vadd.f32 0.0, %v1559
    %v1561 = vpop.f32.mrb[0].mxu0
    %1562 = vdwg.mxu0
    %v1564 = vsel %vm436, %v1115, 0
    %1566 = vmatprep.subr.mxu0 0.0
    %1567 = vmatpush1.msra.mxu0 %v431
    %1568 = vmatprep.subr.mxu0 0.0
    %1569 = vmatpush1.msra.mxu0 0.0
    %1570 = vmatprep.subr.mxu0 0.0
    %1571 = vmatpush1.msra.mxu0 0.0
    %1572 = vmatprep.subr.mxu0 0.0
    %1573 = vmatpush1.msra.mxu0 0.0
    %1574 = vmatprep.subr.mxu0 0.0
    %1575 = vmatpush1.msra.mxu0 0.0
    %1576 = vmatprep.subr.mxu0 0.0
    %1577 = vmatpush1.msra.mxu0 0.0
    %1578 = vmatprep.subr.mxu0 0.0
    %1579 = vmatpush1.msra.mxu0 0.0
    %1580 = vmatprep.subr.mxu0 0.0
    %1581 = vmatpush1.msra.mxu0 0.0
    %1582 = vmatprep.subr.mxu0 0.0
    %1583 = vmatpush1.msra.mxu0 0.0
    %1584 = vmatprep.subr.mxu0 0.0
    %1585 = vmatpush1.msra.mxu0 0.0
    %1586 = vmatprep.subr.mxu0 0.0
    %1587 = vmatpush1.msra.mxu0 0.0
    %1588 = vmatprep.subr.mxu0 0.0
    %1589 = vmatpush1.msra.mxu0 0.0
    %1590 = vmatprep.subr.mxu0 0.0
    %1591 = vmatpush1.msra.mxu0 0.0
    %1592 = vmatprep.subr.mxu0 0.0
    %1593 = vmatpush1.msra.mxu0 0.0
    %1594 = vmatprep.subr.mxu0 0.0
    %1595 = vmatpush1.msra.mxu0 0.0
    %1596 = vmatprep.subr.mxu0 0.0
    %1597 = vmatpush1.msra.mxu0 0.0
    %1598 = vmatprep.subr.mxu0 0.0
    %1599 = vmatpush1.msra.mxu0 0.0
    %1600 = vmatprep.subr.mxu0 0.0
    %1601 = vmatpush1.msra.mxu0 0.0
    %1602 = vmatprep.subr.mxu0 0.0
    %1603 = vmatpush1.msra.mxu0 0.0
    %1604 = vmatprep.subr.mxu0 0.0
    %1605 = vmatpush1.msra.mxu0 0.0
    %1606 = vmatprep.subr.mxu0 0.0
    %1607 = vmatpush1.msra.mxu0 0.0
    %1608 = vmatprep.subr.mxu0 0.0
    %1609 = vmatpush1.msra.mxu0 0.0
    %1610 = vmatprep.subr.mxu0 0.0
    %1611 = vmatpush1.msra.mxu0 0.0
    %1612 = vmatprep.subr.mxu0 0.0
    %1613 = vmatpush1.msra.mxu0 0.0
    %1614 = vmatprep.subr.mxu0 0.0
    %1615 = vmatpush1.msra.mxu0 0.0
    %1616 = vmatprep.subr.mxu0 0.0
    %1617 = vmatpush1.msra.mxu0 0.0
    %1618 = vmatprep.subr.mxu0 0.0
    %1619 = vmatpush1.msra.mxu0 0.0
    %1620 = vmatprep.subr.mxu0 0.0
    %1621 = vmatpush1.msra.mxu0 0.0
    %1622 = vmatprep.subr.mxu0 0.0
    %1623 = vmatpush1.msra.mxu0 0.0
    %1624 = vmatprep.subr.mxu0 0.0
    %1625 = vmatpush1.msra.mxu0 0.0
    %1626 = vmatprep.subr.mxu0 0.0
    %1627 = vmatpush1.msra.mxu0 0.0
    %1628 = vmatprep.subr.mxu0 0.0
    %1629 = vmatpush1.msra.mxu0 0.0
    %1630 = vmatprep.mubr.f32.mxu0 0.0
    %1631 = vmatmul.mubr.f32.gmra.mrb[0].mxu0 %v1564
    %v1632 = vpop.f32.mrb[0].mxu0
    %v1633 = vadd.f32 0.0, %v1632
    %v1634 = vpop.f32.mrb[0].mxu0
    %1635 = vdwg.mxu0
    %v1637 = vsel %vm436, %v1116, 0
    %1639 = vmatprep.subr.mxu0 0.0
    %1640 = vmatpush1.msra.mxu0 %v433
    %1641 = vmatprep.subr.mxu0 0.0
    %1642 = vmatpush1.msra.mxu0 0.0
    %1643 = vmatprep.subr.mxu0 0.0
    %1644 = vmatpush1.msra.mxu0 0.0
    %1645 = vmatprep.subr.mxu0 0.0
    %1646 = vmatpush1.msra.mxu0 0.0
    %1647 = vmatprep.subr.mxu0 0.0
    %1648 = vmatpush1.msra.mxu0 0.0
    %1649 = vmatprep.subr.mxu0 0.0
    %1650 = vmatpush1.msra.mxu0 0.0
    %1651 = vmatprep.subr.mxu0 0.0
    %1652 = vmatpush1.msra.mxu0 0.0
    %1653 = vmatprep.subr.mxu0 0.0
    %1654 = vmatpush1.msra.mxu0 0.0
    %1655 = vmatprep.subr.mxu0 0.0
    %1656 = vmatpush1.msra.mxu0 0.0
    %1657 = vmatprep.subr.mxu0 0.0
    %1658 = vmatpush1.msra.mxu0 0.0
    %1659 = vmatprep.subr.mxu0 0.0
    %1660 = vmatpush1.msra.mxu0 0.0
    %1661 = vmatprep.subr.mxu0 0.0
    %1662 = vmatpush1.msra.mxu0 0.0
    %1663 = vmatprep.subr.mxu0 0.0
    %1664 = vmatpush1.msra.mxu0 0.0
    %1665 = vmatprep.subr.mxu0 0.0
    %1666 = vmatpush1.msra.mxu0 0.0
    %1667 = vmatprep.subr.mxu0 0.0
    %1668 = vmatpush1.msra.mxu0 0.0
    %1669 = vmatprep.subr.mxu0 0.0
    %1670 = vmatpush1.msra.mxu0 0.0
    %1671 = vmatprep.subr.mxu0 0.0
    %1672 = vmatpush1.msra.mxu0 0.0
    %1673 = vmatprep.subr.mxu0 0.0
    %1674 = vmatpush1.msra.mxu0 0.0
    %1675 = vmatprep.subr.mxu0 0.0
    %1676 = vmatpush1.msra.mxu0 0.0
    %1677 = vmatprep.subr.mxu0 0.0
    %1678 = vmatpush1.msra.mxu0 0.0
    %1679 = vmatprep.subr.mxu0 0.0
    %1680 = vmatpush1.msra.mxu0 0.0
    %1681 = vmatprep.subr.mxu0 0.0
    %1682 = vmatpush1.msra.mxu0 0.0
    %1683 = vmatprep.subr.mxu0 0.0
    %1684 = vmatpush1.msra.mxu0 0.0
    %1685 = vmatprep.subr.mxu0 0.0
    %1686 = vmatpush1.msra.mxu0 0.0
    %1687 = vmatprep.subr.mxu0 0.0
    %1688 = vmatpush1.msra.mxu0 0.0
    %1689 = vmatprep.subr.mxu0 0.0
    %1690 = vmatpush1.msra.mxu0 0.0
    %1691 = vmatprep.subr.mxu0 0.0
    %1692 = vmatpush1.msra.mxu0 0.0
    %1693 = vmatprep.subr.mxu0 0.0
    %1694 = vmatpush1.msra.mxu0 0.0
    %1695 = vmatprep.subr.mxu0 0.0
    %1696 = vmatpush1.msra.mxu0 0.0
    %1697 = vmatprep.subr.mxu0 0.0
    %1698 = vmatpush1.msra.mxu0 0.0
    %1699 = vmatprep.subr.mxu0 0.0
    %1700 = vmatpush1.msra.mxu0 0.0
    %1701 = vmatprep.subr.mxu0 0.0
    %1702 = vmatpush1.msra.mxu0 0.0
    %1703 = vmatprep.mubr.f32.mxu0 0.0
    %1704 = vmatmul.mubr.f32.gmra.mrb[0].mxu0 %v1637
    %v1705 = vpop.f32.mrb[0].mxu0
    %v1706 = vadd.f32 0.0, %v1705
    %v1707 = vpop.f32.mrb[0].mxu0
    %1708 = vdwg.mxu0
    %1711 = vrot.lane.b32.xlu0 %v1341, 8
    %v1712 = vpop.permute.xlu0 %1711
    %1713 = vrot.lane.b32.xlu0 %v1414, 8
    %v1714 = vpop.permute.xlu0 %1713
    %1719 = vrot.lane.b32.xlu0 %v1487, 16
    %v1720 = vpop.permute.xlu0 %1719
    %1721 = vrot.lane.b32.xlu0 %v1560, 16
    %v1722 = vpop.permute.xlu0 %1721
    %1727 = vrot.lane.b32.xlu0 %v1633, 24
    %v1728 = vpop.permute.xlu0 %1727
    %1729 = vrot.lane.b32.xlu0 %v1706, 24
    %v1730 = vpop.permute.xlu0 %1729
    %v1733 = vsel %vm436, %v1195, %v1712
    %v1734 = vsel %vm436, %v1268, %v1714
    %v1735 = vsel %vm129, %v1733, %v1720
    %v1736 = vsel %vm129, %v1734, %v1722
    %vm1737 = vcmask 195584
    %v1738 = vsel %vm1737, %v1735, %v1728
    %v1739 = vsel %vm1737, %v1736, %v1730
    %v1740 = vld [vmem:[#allocation11] sm:$0xff]
    %v1741 = vld [vmem:[#allocation11 + $0x8] sm:$0xff]
    %v1742 = vld [vmem:[#allocation11 + $0x10] sm:$0xff]
    %v1743 = vld [vmem:[#allocation11 + $0x18] sm:$0xff]
    %1746 = vrot.lane.b32.xlu0 %v220, 96
    %v1747 = vpop.permute.xlu0 %1746
    %1748 = vrot.lane.b32.xlu0 %v221, 96
    %v1749 = vpop.permute.xlu0 %1748
    %vm1752 = vcmask 261120
    %v1754 = vsel %vm1752, %v1738, 0
    %v1757 = vsel %vm1752, %v1739, 0
    %1759 = vmatprep.subr.mxu0 0.0
    %1760 = vmatpush1.msra.mxu0 %v1740
    %1761 = vmatprep.subr.mxu0 0.0
    %1762 = vmatpush1.msra.mxu0 %v1741
    %1763 = vmatprep.subr.mxu0 0.0
    %1764 = vmatpush1.msra.mxu0 %v1742
    %1765 = vmatprep.subr.mxu0 0.0
    %1766 = vmatpush1.msra.mxu0 %v1743
    %1767 = vmatprep.subr.mxu0 0.0
    %1768 = vmatpush1.msra.mxu0 0.0
    %1769 = vmatprep.subr.mxu0 0.0
    %1770 = vmatpush1.msra.mxu0 0.0
    %1771 = vmatprep.subr.mxu0 0.0
    %1772 = vmatpush1.msra.mxu0 0.0
    %1773 = vmatprep.subr.mxu0 0.0
    %1774 = vmatpush1.msra.mxu0 0.0
    %1775 = vmatprep.subr.mxu0 0.0
    %1776 = vmatpush1.msra.mxu0 0.0
    %1777 = vmatprep.subr.mxu0 0.0
    %1778 = vmatpush1.msra.mxu0 0.0
    %1779 = vmatprep.subr.mxu0 0.0
    %1780 = vmatpush1.msra.mxu0 0.0
    %1781 = vmatprep.subr.mxu0 0.0
    %1782 = vmatpush1.msra.mxu0 0.0
    %1783 = vmatprep.subr.mxu0 0.0
    %1784 = vmatpush1.msra.mxu0 0.0
    %1785 = vmatprep.subr.mxu0 0.0
    %1786 = vmatpush1.msra.mxu0 0.0
    %1787 = vmatprep.subr.mxu0 0.0
    %1788 = vmatpush1.msra.mxu0 0.0
    %1789 = vmatprep.subr.mxu0 0.0
    %1790 = vmatpush1.msra.mxu0 0.0
    %1791 = vmatprep.subr.mxu0 0.0
    %1792 = vmatpush1.msra.mxu0 0.0
    %1793 = vmatprep.subr.mxu0 0.0
    %1794 = vmatpush1.msra.mxu0 0.0
    %1795 = vmatprep.subr.mxu0 0.0
    %1796 = vmatpush1.msra.mxu0 0.0
    %1797 = vmatprep.subr.mxu0 0.0
    %1798 = vmatpush1.msra.mxu0 0.0
    %1799 = vmatprep.subr.mxu0 0.0
    %1800 = vmatpush1.msra.mxu0 0.0
    %1801 = vmatprep.subr.mxu0 0.0
    %1802 = vmatpush1.msra.mxu0 0.0
    %1803 = vmatprep.subr.mxu0 0.0
    %1804 = vmatpush1.msra.mxu0 0.0
    %1805 = vmatprep.subr.mxu0 0.0
    %1806 = vmatpush1.msra.mxu0 0.0
    %1807 = vmatprep.subr.mxu0 0.0
    %1808 = vmatpush1.msra.mxu0 0.0
    %1809 = vmatprep.subr.mxu0 0.0
    %1810 = vmatpush1.msra.mxu0 0.0
    %1811 = vmatprep.subr.mxu0 0.0
    %1812 = vmatpush1.msra.mxu0 0.0
    %1813 = vmatprep.subr.mxu0 0.0
    %1814 = vmatpush1.msra.mxu0 0.0
    %1815 = vmatprep.subr.mxu0 0.0
    %1816 = vmatpush1.msra.mxu0 0.0
    %1817 = vmatprep.subr.mxu0 0.0
    %1818 = vmatpush1.msra.mxu0 0.0
    %1819 = vmatprep.subr.mxu0 0.0
    %1820 = vmatpush1.msra.mxu0 0.0
    %1821 = vmatprep.subr.mxu0 0.0
    %1822 = vmatpush1.msra.mxu0 0.0
    %1823 = vmatprep.mubr.f32.mxu0 0.0
    %1824 = vmatmul.mubr.f32.gmra.mrb[0].mxu0 %v1754
    %v1825 = vpop.f32.mrb[0].mxu0
    %v1826 = vadd.f32 %v1747, %v1825
    %v1827 = vpop.f32.mrb[0].mxu0
    %1828 = vmatprep.mubr.f32.mxu0 0.0
    %1829 = vmatmul.mubr.f32.gmra.mrb[0].mxu0 %v1757
    %v1830 = vpop.f32.mrb[0].mxu0
    %v1831 = vadd.f32 %v1749, %v1830
    %v1832 = vpop.f32.mrb[0].mxu0
    %1833 = vdwg.mxu0
    %v1834 = vsel %vm1752, %v1826, 0.0
    %1835 = vadd.xlane.f32.xlu0 %v1834
    %v1836 = vpop.xlane.xlu0 %1835
    %v1837 = vsel %vm1752, %v1831, 0.0
    %1838 = vadd.xlane.f32.xlu0 %v1837
    %v1839 = vpop.xlane.xlu0 %1838
    %v1840 = vrcp.pop 32.0
    %v1841 = vmul.f32 %v1836, %v1840
    %v1842 = vmul.f32 %v1839, %v1840
    %v1843 = vsub.f32 %v1826, %v1841
    %v1844 = vsub.f32 %v1831, %v1842
    %v1845 = vmul.f32 %v1843, %v1843
    %v1846 = vmul.f32 %v1844, %v1844
    %v1847 = vsel %vm1752, %v1845, 0.0
    %1848 = vadd.xlane.f32.xlu0 %v1847
    %v1849 = vpop.xlane.xlu0 %1848
    %v1850 = vsel %vm1752, %v1846, 0.0
    %1851 = vadd.xlane.f32.xlu0 %v1850
    %v1852 = vpop.xlane.xlu0 %1851
    %v1853 = vmul.f32 %v1849, %v1840
    %v1854 = vmul.f32 %v1852, %v1840
    %v1855 = vadd.f32 %v1853, 1e-05
    %v1856 = vadd.f32 %v1854, 1e-05
    %v1857 = vrsqrt.pop %v1855
    %v1858 = vrsqrt.pop %v1856
    %v1859 = vmul.f32 %v1843, %v1857
    %v1860 = vmul.f32 %v1844, %v1858
    %v1861 = vld [vmem:[%s8] sm:$0x1]
    %v1863 = vlaneseq
    %v1864 = vshrl.u32 %v1863, 7
    %v1865 = vsub.s32 0, %v1864
    %v1866 = vrot.slane %v1861, %v1865
    %v1868 = vmul.f32 %v1859, %v1866
    %v1869 = vmul.f32 %v1860, %v1866
    %v1870 = vld [vmem:[%s9] sm:$0x1]
    %v1872 = vlaneseq
    %v1873 = vshrl.u32 %v1872, 7
    %v1874 = vsub.s32 0, %v1873
    %v1875 = vrot.slane %v1870, %v1874
    %v1877 = vadd.f32 %v1868, %v1875
    %v1878 = vadd.f32 %v1869, %v1875
    %1879 = vst.msk [vmem:[#allocation13] sm:$0xff] %vm1752, %v1877
    %1880 = vst.msk [vmem:[#allocation13 + $0x8] sm:$0xff] %vm1752, %v1878
    // Predicated region
    $region66: #{tpu_custom_call.1} parent=1 // pred_check
      _
    $region67: #{tpu_custom_call.1} parent=1 // pred_check_branch
      %1882 = sbr.rel (0) target = $region69
    $region68: #{tpu_custom_call.1} parent=1 // pred_region
      %s1884 = ssub.s32 256, 256
      %1885 = vsyncadd [#allocation4], %s1884
      %s1886 = sshll.u32 [#allocation13], 4
      %s1887 = int_to_ptr.vmem [resolvable:$true] %s1886
      %1892 = dma.vmem_to_hbm [thread:$0]  %s1887, 256, %s10, [#allocation4], 128, 128, 8
    $region69: #{tpu_custom_call.1} parent=1 // pred_fallthru
      _
    // Predicated region
    $region70: #{tpu_custom_call.1} parent=1 // pred_check
      _
    $region71: #{tpu_custom_call.1} parent=1 // pred_check_branch
      %1894 = sbr.rel (0) target = $region73
    $region72: #{tpu_custom_call.1} parent=1 // pred_region
      %s1896 = ssub.s32 1024, 1024
      %1897 = vsyncadd [#allocation15], %s1896
      %s1898 = sshll.u32 [#allocation14], 4
      %s1899 = int_to_ptr.vmem [resolvable:$true] %s1898
      %1904 = dma.vmem_to_hbm [thread:$0]  %s1899, 1024, %s11, [#allocation15], 128, 128, 8
    $region73: #{tpu_custom_call.1} parent=1 // pred_fallthru
      _
    // Predicated region
    $region74: #{tpu_custom_call.1} parent=1 // pred_check
      _
    $region75: #{tpu_custom_call.1} parent=1 // pred_check_branch
      %1906 = sbr.rel (0) target = $region77
    $region76: #{tpu_custom_call.1} parent=1 // pred_region
      %1907 = dma.done [#allocation4], 256
    $region77: #{tpu_custom_call.1} parent=1 // pred_fallthru
      _
    // Predicated region
    $region78: #{tpu_custom_call.1} parent=1 // pred_check
      _
    $region79: #{tpu_custom_call.1} parent=1 // pred_check_branch
      %1909 = sbr.rel (0) target = $region81
    $region80: #{tpu_custom_call.1} parent=1 // pred_region
      %1910 = dma.done [#allocation15], 1024
    $region81: #{tpu_custom_call.1} parent=1 // pred_fallthru
      _
    %1911 = vsyncpa [#allocation3], 1
    %1912 = vsyncpa [#allocation6], 1
    %1913 = vsyncpa [#allocation9], 1
    %1914 = vsyncpa [#allocation12], 1
    %1915 = vsyncpa [#allocation4], 1
    %1916 = vsyncpa [#allocation15], 1

</llo_original>
